<compile_context>
chip_gen: v7x
topology: tpu7x:2x2x1
jax: 0.10.0
libtpu: 0.0.40
codegen_flags: <defaults>
</compile_context>

<pallas_src>
import functools

import jax
import jax.numpy as jnp
from jax import lax
from jax.experimental import pallas as pl
from jax.experimental.pallas import tpu as pltpu

_EPS = 1e-8
_TEMPERATURE = 0.05
_INV_T = 1.0 / _TEMPERATURE
XI, EPS_PTURB, IP = 0.1, 1.0, 1          # module defaults: xi=0.1, eps=1, ip=1

_VMEM_LIMIT = 32 * 1024 * 1024           # explicit: > v5e 16MiB default, < v7x 64MiB phys
_PARALLEL = pltpu.CompilerParams(dimension_semantics=("parallel",),
                                 vmem_limit_bytes=_VMEM_LIMIT)
_REDUCE = pltpu.CompilerParams(dimension_semantics=("arbitrary",),
                               vmem_limit_bytes=_VMEM_LIMIT)


def _row_tile(b):
    """Batch-row tile: prefer 256 (v6e/v7x MXU), fall back to 128..8, else full."""
    for t in (256, 128, 64, 32, 16, 8):
        if b % t == 0:
            return t
    return b            # block == full array dim is always legal


# --------------------------------------------------------------------------
# Fused projection head: x @ w1 -> ReLU -> h @ w2 -> row-wise L2 normalize
# Forward: batch-parallel grid, weights VMEM-resident across batch tiles.
# --------------------------------------------------------------------------
def _head_fwd_kernel(x_ref, w1_ref, w2_ref, out_ref, h_ref, r_ref):
    x = x_ref[...].astype(jnp.bfloat16)
    w1 = w1_ref[...].astype(jnp.bfloat16)
    w2 = w2_ref[...].astype(jnp.bfloat16)
    h = jnp.maximum(jnp.dot(x, w1, preferred_element_type=jnp.float32), 0.0)
    z = jnp.dot(h.astype(jnp.bfloat16), w2, preferred_element_type=jnp.float32)
    n = jnp.sqrt(jnp.sum(z * z, axis=-1, keepdims=True))
    r = pl.reciprocal(n + _EPS, approx=True)        # EUP slot
    out_ref[...] = z * r
    h_ref[...] = h
    r_ref[...] = r                                   # saved residual, reused in bwd


def _head_fwd_impl(x, w1, w2):
    B, H = x.shape
    H2 = w1.shape[1]
    F = w2.shape[1]
    tm = _row_tile(B)
    out, h, r = pl.pallas_call(
        _head_fwd_kernel,
        out_shape=(jax.ShapeDtypeStruct((B, F), jnp.float32),
                   jax.ShapeDtypeStruct((B, H2), jnp.float32),
                   jax.ShapeDtypeStruct((B, 1), jnp.float32)),
        grid=(B // tm,),
        in_specs=[pl.BlockSpec((tm, H), lambda i: (i, 0)),
                  pl.BlockSpec((H, H2), lambda i: (0, 0)),    # batch-invariant
                  pl.BlockSpec((H2, F), lambda i: (0, 0))],   # batch-invariant
        out_specs=(pl.BlockSpec((tm, F), lambda i: (i, 0)),
                   pl.BlockSpec((tm, H2), lambda i: (i, 0)),
                   pl.BlockSpec((tm, 1), lambda i: (i, 0))),
        compiler_params=_PARALLEL,
    )(x, w1, w2)
    return out, h, r


def _dz_dh(g, out, r, h, w2_bf16):
    """Shared backward algebra for one batch tile.

    out = z * r with r = 1/(||z||+eps); dz ~= (g - <g,out> out) * r
    (uses 1/(||z||+eps) ~= 1/||z||, fine for a perturbation direction).
    """
    gdoto = jnp.sum(g * out, axis=-1, keepdims=True)
    dz = (g - gdoto * out) * r
    dh = lax.dot_general(dz.astype(jnp.bfloat16), w2_bf16,
                         (((1,), (1,)), ((), ())),
                         preferred_element_type=jnp.float32)
    dh = jnp.where(h > 0.0, dh, 0.0)
    return dz, dh


def _head_dx_kernel(g_ref, w1_ref, w2_ref, h_ref, out_ref, r_ref, dx_ref):
    _, dh = _dz_dh(g_ref[...], out_ref[...], r_ref[...], h_ref[...],
                   w2_ref[...].astype(jnp.bfloat16))
    dx_ref[...] = lax.dot_general(dh.astype(jnp.bfloat16),
                                  w1_ref[...].astype(jnp.bfloat16),
                                  (((1,), (1,)), ((), ())),
                                  preferred_element_type=jnp.float32)


def _head_dx_impl(g, w1, w2, h, out, r):
    B, F = g.shape
    H, H2 = w1.shape
    tm = _row_tile(B)
    return pl.pallas_call(
        _head_dx_kernel,
        out_shape=jax.ShapeDtypeStruct((B, H), jnp.float32),
        grid=(B // tm,),
        in_specs=[pl.BlockSpec((tm, F), lambda i: (i, 0)),
                  pl.BlockSpec((H, H2), lambda i: (0, 0)),
                  pl.BlockSpec((H2, F), lambda i: (0, 0)),
                  pl.BlockSpec((tm, H2), lambda i: (i, 0)),
                  pl.BlockSpec((tm, F), lambda i: (i, 0)),
                  pl.BlockSpec((tm, 1), lambda i: (i, 0))],
        out_specs=pl.BlockSpec((tm, H), lambda i: (i, 0)),
        compiler_params=_PARALLEL,
    )(g, w1, w2, h, out, r)


def _head_dw_kernel(g_ref, x_ref, w2_ref, h_ref, out_ref, r_ref,
                    dw1_ref, dw2_ref):
    i = pl.program_id(0)
    h = h_ref[...]
    dz, dh = _dz_dh(g_ref[...], out_ref[...], r_ref[...], h,
                    w2_ref[...].astype(jnp.bfloat16))
    # per-batch-tile contributions, contracting the (small) batch-tile dim 0
    dw2_tile = lax.dot_general(h.astype(jnp.bfloat16), dz.astype(jnp.bfloat16),
                               (((0,), (0,)), ((), ())),
                               preferred_element_type=jnp.float32)
    dw1_tile = lax.dot_general(x_ref[...].astype(jnp.bfloat16),
                               dh.astype(jnp.bfloat16),
                               (((0,), (0,)), ((), ())),
                               preferred_element_type=jnp.float32)

    @pl.when(i == 0)
    def _():
        dw1_ref[...] = jnp.zeros_like(dw1_ref)
        dw2_ref[...] = jnp.zeros_like(dw2_ref)

    dw1_ref[...] += dw1_tile
    dw2_ref[...] += dw2_tile


def _head_dw_impl(g, x, w2, h, out, r):
    B, F = g.shape
    H = x.shape[1]
    H2 = w2.shape[0]
    tm = _row_tile(B)
    return pl.pallas_call(
        _head_dw_kernel,
        out_shape=(jax.ShapeDtypeStruct((H, H2), jnp.float32),
                   jax.ShapeDtypeStruct((H2, F), jnp.float32)),
        grid=(B // tm,),
        in_specs=[pl.BlockSpec((tm, F), lambda i: (i, 0)),
                  pl.BlockSpec((tm, H), lambda i: (i, 0)),
                  pl.BlockSpec((H2, F), lambda i: (0, 0)),
                  pl.BlockSpec((tm, H2), lambda i: (i, 0)),
                  pl.BlockSpec((tm, F), lambda i: (i, 0)),
                  pl.BlockSpec((tm, 1), lambda i: (i, 0))],
        out_specs=(pl.BlockSpec((H, H2), lambda i: (0, 0)),   # batch-reduction acc
                   pl.BlockSpec((H2, F), lambda i: (0, 0))),  # batch-reduction acc
        compiler_params=_REDUCE,
    )(g, x, w2, h, out, r)


@jax.custom_vjp
def contrast_logits(x, w1, w2):
    """Synthetic model.contrast_logits: normalize(relu(x@w1)@w2)."""
    out, _, _ = _head_fwd_impl(x, w1, w2)
    return out


def _contrast_fwd(x, w1, w2):
    out, h, r = _head_fwd_impl(x, w1, w2)
    return out, (x, w1, w2, h, out, r)


def _contrast_bwd(res, g):
    x, w1, w2, h, out, r = res
    dx = _head_dx_impl(g, w1, w2, h, out, r)
    # Separate kernel so XLA DCE drops it when params are not differentiated
    # (the VaSCL power iteration only needs d-grad; torch zero_grad()s these).
    dw1, dw2 = _head_dw_impl(g, x, w2, h, out, r)
    return dx, dw1, dw2


contrast_logits.defvjp(_contrast_fwd, _contrast_bwd)


# --------------------------------------------------------------------------
# Scaled similarity: (A @ B^T) / temperature.
# Gradient flows only to B (A == cnst is computed under no_grad in VaSCL).
# --------------------------------------------------------------------------
def _sim_fwd_kernel(a_ref, b_ref, o_ref):
    o_ref[...] = lax.dot_general(a_ref[...].astype(jnp.bfloat16),
                                 b_ref[...].astype(jnp.bfloat16),
                                 (((1,), (1,)), ((), ())),
                                 preferred_element_type=jnp.float32) * _INV_T


def _sim_fwd_impl(a, b):
    B, D = a.shape
    B2 = b.shape[0]
    tm = _row_tile(B)
    return pl.pallas_call(
        _sim_fwd_kernel,
        out_shape=jax.ShapeDtypeStruct((B, B2), jnp.float32),
        grid=(B // tm,),
        in_specs=[pl.BlockSpec((tm, D), lambda i: (i, 0)),
                  pl.BlockSpec((B2, D), lambda i: (0, 0))],   # b resident
        out_specs=pl.BlockSpec((tm, B2), lambda i: (i, 0)),
        compiler_params=_PARALLEL,
    )(a, b)


def _sim_db_kernel(g_ref, a_ref, db_ref):
    i = pl.program_id(0)
    db_tile = lax.dot_general(g_ref[...].astype(jnp.bfloat16),
                              a_ref[...].astype(jnp.bfloat16),
                              (((0,), (0,)), ((), ())),
                              preferred_element_type=jnp.float32) * _INV_T

    @pl.when(i == 0)
    def _():
        db_ref[...] = jnp.zeros_like(db_ref)

    db_ref[...] += db_tile


def _sim_db_impl(g, a):
    B, B2 = g.shape
    D = a.shape[1]
    tm = _row_tile(B)
    return pl.pallas_call(
        _sim_db_kernel,
        out_shape=jax.ShapeDtypeStruct((B2, D), jnp.float32),
        grid=(B // tm,),
        in_specs=[pl.BlockSpec((tm, B2), lambda i: (i, 0)),
                  pl.BlockSpec((tm, D), lambda i: (i, 0))],
        out_specs=pl.BlockSpec((B2, D), lambda i: (0, 0)),    # batch-reduction acc
        compiler_params=_REDUCE,
    )(g, a)


@jax.custom_vjp
def scaled_sim(a, b):
    """(A @ B^T) / T.  VJP only produces a gradient for `b`; `a` is treated as a
    constant (matches VaSCL, where cnst comes from torch.no_grad())."""
    return _sim_fwd_impl(a, b)


def _sim_fwd(a, b):
    return _sim_fwd_impl(a, b), (a,)


def _sim_bwd(res, g):
    (a,) = res
    db = _sim_db_impl(g, a)
    return jnp.zeros_like(a), db    # zero cotangent for the no-grad side (DCE'd)


scaled_sim.defvjp(_sim_fwd, _sim_bwd)


# --------------------------------------------------------------------------
# Row-wise L2 normalisation of the perturbation d (optionally fusing the -0.5
# shift); only used OUTSIDE the grad trace, so no custom_vjp needed.
# --------------------------------------------------------------------------
def _l2norm_kernel(x_ref, o_ref, *, shift):
    x = x_ref[...] - shift
    n = jnp.sqrt(jnp.sum(x * x, axis=-1, keepdims=True))
    o_ref[...] = x * pl.reciprocal(n + _EPS, approx=True)


def l2_normalize(x, shift=0.0):
    """Matches _l2_normalize for 2-D inputs: (x - shift) / (||row|| + 1e-8)."""
    B, D = x.shape
    tm = _row_tile(B)
    return pl.pallas_call(
        functools.partial(_l2norm_kernel, shift=shift),
        out_shape=jax.ShapeDtypeStruct((B, D), jnp.float32),
        grid=(B // tm,),
        in_specs=[pl.BlockSpec((tm, D), lambda i: (i, 0))],
        out_specs=pl.BlockSpec((tm, D), lambda i: (i, 0)),
        compiler_params=_PARALLEL,
    )(x)


# --------------------------------------------------------------------------
# Synthetic VaSCL NCE criteria
# --------------------------------------------------------------------------
def _nce_direction(sim, hard_indices):
    pos = jnp.diagonal(sim)                                   # (B,)
    # TODO(synk): hard-negative gather + logsumexp stays in plain JAX
    # (data-dependent gather); fuse into the sim kernel via scalar prefetch
    # at real batch sizes.
    hard = jnp.take_along_axis(sim, hard_indices, axis=1)     # (B, K)
    logits = jnp.concatenate([pos[:, None], hard], axis=1)    # (B, K+1)
    return jnp.mean(jax.nn.logsumexp(logits, axis=1) - pos)


def uni_criterion(cnst, cnst_hat, hard_indices):
    sim = scaled_sim(cnst, cnst_hat)                          # fused A.B^T / T
    return {"lds_loss": _nce_direction(sim, hard_indices)}


def bi_criterion(cnst, cnst_hat, hard_indices):
    sim = scaled_sim(cnst, cnst_hat)                          # one matmul, both dirs
    l12 = _nce_direction(sim, hard_indices)
    l21 = _nce_direction(sim.T, hard_indices)
    return {"lds_loss": l12 + l21, "lds_loss_fwd": l12, "lds_loss_bwd": l21}


# --------------------------------------------------------------------------
# VaSCL_Pturb forward
# --------------------------------------------------------------------------
def vascl_pturb_forward(params, inputs, hard_indices, rand_u01):
    w1, w2 = params["w1"], params["w2"]

    # with torch.no_grad(): cnst = model.contrast_logits(inputs)
    cnst = lax.stop_gradient(contrast_logits(inputs, w1, w2))

    # d = torch.rand(inputs.shape).sub(0.5);  d = _l2_normalize(d)
    d = l2_normalize(rand_u01, shift=0.5)

    # TODO(synk): _disable_tracking_bn_stats / model.zero_grad are stateful
    # torch mechanics; the synthetic JAX model is stateless so they are no-ops.
    def lds(dd):
        cnst_hat = contrast_logits(inputs + XI * dd, w1, w2)
        return uni_criterion(cnst, cnst_hat, hard_indices)["lds_loss"]

    for _ in range(IP):
        grad_d = jax.grad(lds)(d)          # backward runs the Pallas dx/db kernels
        d = l2_normalize(grad_d)

    cnst_hat = contrast_logits(inputs + EPS_PTURB * d, w1, w2)
    return bi_criterion(cnst, cnst_hat, hard_indices)


# --------------------------------------------------------------------------
# Main
# --------------------------------------------------------------------------
if __name__ == "__main__":
    # batch, hidden, proj hidden, feature dim, #hard negatives.
    # Feature dims are 128-multiples so feature-axis stores are lane-dense.
    B, H, H2, F, K = 8, 128, 128, 128, 4

    key = jax.random.PRNGKey(0)
    k_in, k_w1, k_w2, k_d, k_hard = jax.random.split(key, 5)

    inputs = jax.random.normal(k_in, (B, H), dtype=jnp.float32)
    params = {
        "w1": jax.random.normal(k_w1, (H, H2), dtype=jnp.float32) / jnp.sqrt(H),
        "w2": jax.random.normal(k_w2, (H2, F), dtype=jnp.float32) / jnp.sqrt(H2),
    }
    rand_u01 = jax.random.uniform(k_d, (B, H), dtype=jnp.float32)  # torch.rand analogue
    hard_indices = jax.random.randint(k_hard, (B, K), 0, B, dtype=jnp.int32)

    fwd = jax.jit(vascl_pturb_forward)
    adv_cnst = fwd(params, inputs, hard_indices, rand_u01)
    adv_cnst = jax.block_until_ready(adv_cnst)

    assert jnp.isfinite(adv_cnst["lds_loss"]).item()
    assert jnp.isfinite(adv_cnst["lds_loss_fwd"]).item()
    assert jnp.isfinite(adv_cnst["lds_loss_bwd"]).item()
    print("KERNEL_OK")
</pallas_src>

<mosaic_0001>
module attributes {stable_mosaic.version = 11 : i64} {
  func.func private @main(%arg0: i32) attributes {dimension_semantics = [#tpu.dimension_semantics<core_parallel>], iteration_bounds = array<i64: 2>, tpu.core_type = #tpu.core_type<sc_scalar_subcore>, window_params = []} {
    return
  }
}

module attributes {stable_mosaic.version = 11 : i64} {
  func.func private @main(%arg0: i32) attributes {dimension_semantics = [#tpu.dimension_semantics<core_parallel>], iteration_bounds = array<i64: 2>, tpu.core_type = #tpu.core_type<sc_scalar_subcore>, window_params = []} {
    return
  }
}

module attributes {stable_mosaic.version = 11 : i64} {
  func.func @_l2norm_kernel(%arg0: i32, %arg1: memref<8x128xf32, #tpu.memory_space<vmem>>, %arg2: memref<8x128xf32, #tpu.memory_space<vmem>>) attributes {dimension_semantics = [#tpu.dimension_semantics<parallel>], iteration_bounds = array<i64: 1>, scalar_prefetch = 0 : i64, scratch_operands = 0 : i64, tpu.core_type = #tpu.core_type<tc>, window_params = [{transform_indices = @transform_0, window_bounds = array<i64: 8, 128>}, {transform_indices = @transform_1, window_bounds = array<i64: 8, 128>}]} {
    %c0 = arith.constant 0 : index
    %c0_0 = arith.constant 0 : index
    %0 = vector.load %arg1[%c0, %c0_0] : memref<8x128xf32, #tpu.memory_space<vmem>>, vector<8x128xf32>
    %cst = arith.constant 5.000000e-01 : f32
    %1 = vector.broadcast %cst : f32 to vector<8x128xf32>
    %2 = arith.subf %0, %1 : vector<8x128xf32>
    %3 = arith.mulf %2, %2 : vector<8x128xf32>
    %cst_1 = arith.constant dense<0.000000e+00> : vector<8xf32>
    %4 = vector.multi_reduction <add>, %3, %cst_1 [1] : vector<8x128xf32> to vector<8xf32>
    %5 = vector.shape_cast %4 : vector<8xf32> to vector<8x1xf32>
    %6 = math.sqrt %5 : vector<8x1xf32>
    %cst_2 = arith.constant 9.99999993E-9 : f32
    %7 = vector.broadcast %cst_2 : f32 to vector<8x1xf32>
    %8 = arith.addf %6, %7 : vector<8x1xf32>
    %9 = tpu.reciprocal %8 {approx = true} : vector<8x1xf32> -> vector<8x1xf32>
    %10 = vector.broadcast %9 : vector<8x1xf32> to vector<8x128xf32>
    %11 = arith.mulf %2, %10 : vector<8x128xf32>
    %c0_3 = arith.constant 0 : index
    %c0_4 = arith.constant 0 : index
    %12 = vector.load %arg2[%c0_3, %c0_4] : memref<8x128xf32, #tpu.memory_space<vmem>>, vector<8x128xf32>
    tpu.vector_store %arg2[%c0_3, %c0_4], %11 {strides = array<i32>} : memref<8x128xf32, #tpu.memory_space<vmem>>, vector<8x128xf32>,
    return
  }
  func.func @transform_0(%arg0: i32) -> (i32, i32) {
    %c0_i32 = arith.constant 0 : i32
    %c0_i32_0 = arith.constant 0 : i32
    return %arg0, %c0_i32 : i32, i32
  }
  func.func @transform_1(%arg0: i32) -> (i32, i32) {
    %c0_i32 = arith.constant 0 : i32
    %c0_i32_0 = arith.constant 0 : i32
    return %arg0, %c0_i32 : i32, i32
  }
}

module attributes {stable_mosaic.version = 11 : i64} {
  func.func @_head_fwd_kernel(%arg0: i32, %arg1: memref<8x128xf32, #tpu.memory_space<vmem>>, %arg2: memref<128x128xf32, #tpu.memory_space<vmem>>, %arg3: memref<128x128xf32, #tpu.memory_space<vmem>>, %arg4: memref<8x128xf32, #tpu.memory_space<vmem>>, %arg5: memref<8x128xf32, #tpu.memory_space<vmem>>, %arg6: memref<8x1xf32, #tpu.memory_space<vmem>>) attributes {dimension_semantics = [#tpu.dimension_semantics<parallel>], iteration_bounds = array<i64: 1>, scalar_prefetch = 0 : i64, scratch_operands = 0 : i64, tpu.core_type = #tpu.core_type<tc>, window_params = [{transform_indices = @transform_0, window_bounds = array<i64: 8, 128>}, {pipeline_mode = #tpu.pipeline_mode<synchronous>, transform_indices = @transform_1, window_bounds = array<i64: 128, 128>}, {pipeline_mode = #tpu.pipeline_mode<synchronous>, transform_indices = @transform_2, window_bounds = array<i64: 128, 128>}, {transform_indices = @transform_3, window_bounds = array<i64: 8, 128>}, {transform_indices = @transform_4, window_bounds = array<i64: 8, 128>}, {transform_indices = @transform_5, window_bounds = array<i64: 8, 1>}]} {
    %c0 = arith.constant 0 : index
    %c0_0 = arith.constant 0 : index
    %0 = vector.load %arg1[%c0, %c0_0] : memref<8x128xf32, #tpu.memory_space<vmem>>, vector<8x128xf32>
    %1 = arith.truncf %0 : vector<8x128xf32> to vector<8x128xbf16>
    %c0_1 = arith.constant 0 : index
    %c0_2 = arith.constant 0 : index
    %2 = vector.load %arg2[%c0_1, %c0_2] : memref<128x128xf32, #tpu.memory_space<vmem>>, vector<128x128xf32>
    %3 = arith.truncf %2 : vector<128x128xf32> to vector<128x128xbf16>
    %c0_3 = arith.constant 0 : index
    %c0_4 = arith.constant 0 : index
    %4 = vector.load %arg3[%c0_3, %c0_4] : memref<128x128xf32, #tpu.memory_space<vmem>>, vector<128x128xf32>
    %5 = arith.truncf %4 : vector<128x128xf32> to vector<128x128xbf16>
    %cst = arith.constant dense<0.000000e+00> : vector<8x128xf32>
    %6 = tpu.matmul %1, %3, %cst {dimension_numbers = #tpu.dot_dimension_numbers<[1], [0], [0], [1], [0, 0, 1, 1], [], []>} : vector<8x128xbf16>, vector<128x128xbf16>, vector<8x128xf32> -> vector<8x128xf32>
    %cst_5 = arith.constant 0.000000e+00 : f32
    %7 = vector.broadcast %cst_5 : f32 to vector<8x128xf32>
    %8 = arith.maximumf %6, %7 : vector<8x128xf32>
    %9 = arith.truncf %8 : vector<8x128xf32> to vector<8x128xbf16>
    %cst_6 = arith.constant dense<0.000000e+00> : vector<8x128xf32>
    %10 = tpu.matmul %9, %5, %cst_6 {dimension_numbers = #tpu.dot_dimension_numbers<[1], [0], [0], [1], [0, 0, 1, 1], [], []>} : vector<8x128xbf16>, vector<128x128xbf16>, vector<8x128xf32> -> vector<8x128xf32>
    %11 = arith.mulf %10, %10 : vector<8x128xf32>
    %cst_7 = arith.constant dense<0.000000e+00> : vector<8xf32>
    %12 = vector.multi_reduction <add>, %11, %cst_7 [1] : vector<8x128xf32> to vector<8xf32>
    %13 = vector.shape_cast %12 : vector<8xf32> to vector<8x1xf32>
    %14 = math.sqrt %13 : vector<8x1xf32>
    %cst_8 = arith.constant 9.99999993E-9 : f32
    %15 = vector.broadcast %cst_8 : f32 to vector<8x1xf32>
    %16 = arith.addf %14, %15 : vector<8x1xf32>
    %17 = tpu.reciprocal %16 {approx = true} : vector<8x1xf32> -> vector<8x1xf32>
    %18 = vector.broadcast %17 : vector<8x1xf32> to vector<8x128xf32>
    %19 = arith.mulf %10, %18 : vector<8x128xf32>
    %c0_9 = arith.constant 0 : index
    %c0_10 = arith.constant 0 : index
    %20 = vector.load %arg4[%c0_9, %c0_10] : memref<8x128xf32, #tpu.memory_space<vmem>>, vector<8x128xf32>
    tpu.vector_store %arg4[%c0_9, %c0_10], %19 {strides = array<i32>} : memref<8x128xf32, #tpu.memory_space<vmem>>, vector<8x128xf32>,
    %c0_11 = arith.constant 0 : index
    %c0_12 = arith.constant 0 : index
    %21 = vector.load %arg5[%c0_11, %c0_12] : memref<8x128xf32, #tpu.memory_space<vmem>>, vector<8x128xf32>
    tpu.vector_store %arg5[%c0_11, %c0_12], %8 {strides = array<i32>} : memref<8x128xf32, #tpu.memory_space<vmem>>, vector<8x128xf32>,
    %c0_13 = arith.constant 0 : index
    %c0_14 = arith.constant 0 : index
    %22 = vector.load %arg6[%c0_13, %c0_14] : memref<8x1xf32, #tpu.memory_space<vmem>>, vector<8x1xf32>
    tpu.vector_store %arg6[%c0_13, %c0_14], %17 {strides = array<i32>} : memref<8x1xf32, #tpu.memory_space<vmem>>, vector<8x1xf32>,
    return
  }
  func.func @transform_0(%arg0: i32) -> (i32, i32) {
    %c0_i32 = arith.constant 0 : i32
    %c0_i32_0 = arith.constant 0 : i32
    return %arg0, %c0_i32 : i32, i32
  }
  func.func @transform_1(%arg0: i32) -> (i32, i32) {
    %c0_i32 = arith.constant 0 : i32
    %c0_i32_0 = arith.constant 0 : i32
    %c0_i32_1 = arith.constant 0 : i32
    return %c0_i32, %c0_i32_0 : i32, i32
  }
  func.func @transform_2(%arg0: i32) -> (i32, i32) {
    %c0_i32 = arith.constant 0 : i32
    %c0_i32_0 = arith.constant 0 : i32
    %c0_i32_1 = arith.constant 0 : i32
    return %c0_i32, %c0_i32_0 : i32, i32
  }
  func.func @transform_3(%arg0: i32) -> (i32, i32) {
    %c0_i32 = arith.constant 0 : i32
    %c0_i32_0 = arith.constant 0 : i32
    return %arg0, %c0_i32 : i32, i32
  }
  func.func @transform_4(%arg0: i32) -> (i32, i32) {
    %c0_i32 = arith.constant 0 : i32
    %c0_i32_0 = arith.constant 0 : i32
    return %arg0, %c0_i32 : i32, i32
  }
  func.func @transform_5(%arg0: i32) -> (i32, i32) {
    %c0_i32 = arith.constant 0 : i32
    %c0_i32_0 = arith.constant 0 : i32
    return %arg0, %c0_i32 : i32, i32
  }
}

module attributes {stable_mosaic.version = 11 : i64} {
  func.func @_head_fwd_kernel(%arg0: i32, %arg1: memref<8x128xf32, #tpu.memory_space<vmem>>, %arg2: memref<128x128xf32, #tpu.memory_space<vmem>>, %arg3: memref<128x128xf32, #tpu.memory_space<vmem>>, %arg4: memref<8x128xf32, #tpu.memory_space<vmem>>, %arg5: memref<8x128xf32, #tpu.memory_space<vmem>>, %arg6: memref<8x1xf32, #tpu.memory_space<vmem>>) attributes {dimension_semantics = [#tpu.dimension_semantics<parallel>], iteration_bounds = array<i64: 1>, scalar_prefetch = 0 : i64, scratch_operands = 0 : i64, tpu.core_type = #tpu.core_type<tc>, window_params = [{transform_indices = @transform_0, window_bounds = array<i64: 8, 128>}, {pipeline_mode = #tpu.pipeline_mode<synchronous>, transform_indices = @transform_1, window_bounds = array<i64: 128, 128>}, {pipeline_mode = #tpu.pipeline_mode<synchronous>, transform_indices = @transform_2, window_bounds = array<i64: 128, 128>}, {transform_indices = @transform_3, window_bounds = array<i64: 8, 128>}, {transform_indices = @transform_4, window_bounds = array<i64: 8, 128>}, {transform_indices = @transform_5, window_bounds = array<i64: 8, 1>}]} {
    %c0 = arith.constant 0 : index
    %c0_0 = arith.constant 0 : index
    %0 = vector.load %arg1[%c0, %c0_0] : memref<8x128xf32, #tpu.memory_space<vmem>>, vector<8x128xf32>
    %1 = arith.truncf %0 : vector<8x128xf32> to vector<8x128xbf16>
    %c0_1 = arith.constant 0 : index
    %c0_2 = arith.constant 0 : index
    %2 = vector.load %arg2[%c0_1, %c0_2] : memref<128x128xf32, #tpu.memory_space<vmem>>, vector<128x128xf32>
    %3 = arith.truncf %2 : vector<128x128xf32> to vector<128x128xbf16>
    %c0_3 = arith.constant 0 : index
    %c0_4 = arith.constant 0 : index
    %4 = vector.load %arg3[%c0_3, %c0_4] : memref<128x128xf32, #tpu.memory_space<vmem>>, vector<128x128xf32>
    %5 = arith.truncf %4 : vector<128x128xf32> to vector<128x128xbf16>
    %cst = arith.constant dense<0.000000e+00> : vector<8x128xf32>
    %6 = tpu.matmul %1, %3, %cst {dimension_numbers = #tpu.dot_dimension_numbers<[1], [0], [0], [1], [0, 0, 1, 1], [], []>} : vector<8x128xbf16>, vector<128x128xbf16>, vector<8x128xf32> -> vector<8x128xf32>
    %cst_5 = arith.constant 0.000000e+00 : f32
    %7 = vector.broadcast %cst_5 : f32 to vector<8x128xf32>
    %8 = arith.maximumf %6, %7 : vector<8x128xf32>
    %9 = arith.truncf %8 : vector<8x128xf32> to vector<8x128xbf16>
    %cst_6 = arith.constant dense<0.000000e+00> : vector<8x128xf32>
    %10 = tpu.matmul %9, %5, %cst_6 {dimension_numbers = #tpu.dot_dimension_numbers<[1], [0], [0], [1], [0, 0, 1, 1], [], []>} : vector<8x128xbf16>, vector<128x128xbf16>, vector<8x128xf32> -> vector<8x128xf32>
    %11 = arith.mulf %10, %10 : vector<8x128xf32>
    %cst_7 = arith.constant dense<0.000000e+00> : vector<8xf32>
    %12 = vector.multi_reduction <add>, %11, %cst_7 [1] : vector<8x128xf32> to vector<8xf32>
    %13 = vector.shape_cast %12 : vector<8xf32> to vector<8x1xf32>
    %14 = math.sqrt %13 : vector<8x1xf32>
    %cst_8 = arith.constant 9.99999993E-9 : f32
    %15 = vector.broadcast %cst_8 : f32 to vector<8x1xf32>
    %16 = arith.addf %14, %15 : vector<8x1xf32>
    %17 = tpu.reciprocal %16 {approx = true} : vector<8x1xf32> -> vector<8x1xf32>
    %18 = vector.broadcast %17 : vector<8x1xf32> to vector<8x128xf32>
    %19 = arith.mulf %10, %18 : vector<8x128xf32>
    %c0_9 = arith.constant 0 : index
    %c0_10 = arith.constant 0 : index
    %20 = vector.load %arg4[%c0_9, %c0_10] : memref<8x128xf32, #tpu.memory_space<vmem>>, vector<8x128xf32>
    tpu.vector_store %arg4[%c0_9, %c0_10], %19 {strides = array<i32>} : memref<8x128xf32, #tpu.memory_space<vmem>>, vector<8x128xf32>,
    %c0_11 = arith.constant 0 : index
    %c0_12 = arith.constant 0 : index
    %21 = vector.load %arg5[%c0_11, %c0_12] : memref<8x128xf32, #tpu.memory_space<vmem>>, vector<8x128xf32>
    tpu.vector_store %arg5[%c0_11, %c0_12], %8 {strides = array<i32>} : memref<8x128xf32, #tpu.memory_space<vmem>>, vector<8x128xf32>,
    %c0_13 = arith.constant 0 : index
    %c0_14 = arith.constant 0 : index
    %22 = vector.load %arg6[%c0_13, %c0_14] : memref<8x1xf32, #tpu.memory_space<vmem>>, vector<8x1xf32>
    tpu.vector_store %arg6[%c0_13, %c0_14], %17 {strides = array<i32>} : memref<8x1xf32, #tpu.memory_space<vmem>>, vector<8x1xf32>,
    return
  }
  func.func @transform_0(%arg0: i32) -> (i32, i32) {
    %c0_i32 = arith.constant 0 : i32
    %c0_i32_0 = arith.constant 0 : i32
    return %arg0, %c0_i32 : i32, i32
  }
  func.func @transform_1(%arg0: i32) -> (i32, i32) {
    %c0_i32 = arith.constant 0 : i32
    %c0_i32_0 = arith.constant 0 : i32
    %c0_i32_1 = arith.constant 0 : i32
    return %c0_i32, %c0_i32_0 : i32, i32
  }
  func.func @transform_2(%arg0: i32) -> (i32, i32) {
    %c0_i32 = arith.constant 0 : i32
    %c0_i32_0 = arith.constant 0 : i32
    %c0_i32_1 = arith.constant 0 : i32
    return %c0_i32, %c0_i32_0 : i32, i32
  }
  func.func @transform_3(%arg0: i32) -> (i32, i32) {
    %c0_i32 = arith.constant 0 : i32
    %c0_i32_0 = arith.constant 0 : i32
    return %arg0, %c0_i32 : i32, i32
  }
  func.func @transform_4(%arg0: i32) -> (i32, i32) {
    %c0_i32 = arith.constant 0 : i32
    %c0_i32_0 = arith.constant 0 : i32
    return %arg0, %c0_i32 : i32, i32
  }
  func.func @transform_5(%arg0: i32) -> (i32, i32) {
    %c0_i32 = arith.constant 0 : i32
    %c0_i32_0 = arith.constant 0 : i32
    return %arg0, %c0_i32 : i32, i32
  }
}

module attributes {stable_mosaic.version = 11 : i64} {
  func.func @_sim_fwd_kernel(%arg0: i32, %arg1: memref<8x128xf32, #tpu.memory_space<vmem>>, %arg2: memref<8x128xf32, #tpu.memory_space<vmem>>, %arg3: memref<8x8xf32, #tpu.memory_space<vmem>>) attributes {dimension_semantics = [#tpu.dimension_semantics<parallel>], iteration_bounds = array<i64: 1>, scalar_prefetch = 0 : i64, scratch_operands = 0 : i64, tpu.core_type = #tpu.core_type<tc>, window_params = [{transform_indices = @transform_0, window_bounds = array<i64: 8, 128>}, {pipeline_mode = #tpu.pipeline_mode<synchronous>, transform_indices = @transform_1, window_bounds = array<i64: 8, 128>}, {transform_indices = @transform_2, window_bounds = array<i64: 8, 8>}]} {
    %c0 = arith.constant 0 : index
    %c0_0 = arith.constant 0 : index
    %0 = vector.load %arg1[%c0, %c0_0] : memref<8x128xf32, #tpu.memory_space<vmem>>, vector<8x128xf32>
    %1 = arith.truncf %0 : vector<8x128xf32> to vector<8x128xbf16>
    %c0_1 = arith.constant 0 : index
    %c0_2 = arith.constant 0 : index
    %2 = vector.load %arg2[%c0_1, %c0_2] : memref<8x128xf32, #tpu.memory_space<vmem>>, vector<8x128xf32>
    %3 = arith.truncf %2 : vector<8x128xf32> to vector<8x128xbf16>
    %cst = arith.constant dense<0.000000e+00> : vector<8x8xf32>
    %4 = tpu.matmul %1, %3, %cst {dimension_numbers = #tpu.dot_dimension_numbers<[1], [1], [0], [0], [0, 0, 1, 0], [], []>} : vector<8x128xbf16>, vector<8x128xbf16>, vector<8x8xf32> -> vector<8x8xf32>
    %cst_3 = arith.constant 2.000000e+01 : f32
    %5 = vector.broadcast %cst_3 : f32 to vector<8x8xf32>
    %6 = arith.mulf %4, %5 : vector<8x8xf32>
    %c0_4 = arith.constant 0 : index
    %c0_5 = arith.constant 0 : index
    %7 = vector.load %arg3[%c0_4, %c0_5] : memref<8x8xf32, #tpu.memory_space<vmem>>, vector<8x8xf32>
    tpu.vector_store %arg3[%c0_4, %c0_5], %6 {strides = array<i32>} : memref<8x8xf32, #tpu.memory_space<vmem>>, vector<8x8xf32>,
    return
  }
  func.func @transform_0(%arg0: i32) -> (i32, i32) {
    %c0_i32 = arith.constant 0 : i32
    %c0_i32_0 = arith.constant 0 : i32
    return %arg0, %c0_i32 : i32, i32
  }
  func.func @transform_1(%arg0: i32) -> (i32, i32) {
    %c0_i32 = arith.constant 0 : i32
    %c0_i32_0 = arith.constant 0 : i32
    %c0_i32_1 = arith.constant 0 : i32
    return %c0_i32, %c0_i32_0 : i32, i32
  }
  func.func @transform_2(%arg0: i32) -> (i32, i32) {
    %c0_i32 = arith.constant 0 : i32
    %c0_i32_0 = arith.constant 0 : i32
    return %arg0, %c0_i32 : i32, i32
  }
}

module attributes {stable_mosaic.version = 11 : i64} {
  func.func @_sim_db_kernel(%arg0: i32, %arg1: memref<8x8xf32, #tpu.memory_space<vmem>>, %arg2: memref<8x128xf32, #tpu.memory_space<vmem>>, %arg3: memref<8x128xf32, #tpu.memory_space<vmem>>) attributes {dimension_semantics = [#tpu.dimension_semantics<arbitrary>], iteration_bounds = array<i64: 1>, scalar_prefetch = 0 : i64, scratch_operands = 0 : i64, tpu.core_type = #tpu.core_type<tc>, window_params = [{transform_indices = @transform_0, window_bounds = array<i64: 8, 8>}, {transform_indices = @transform_1, window_bounds = array<i64: 8, 128>}, {pipeline_mode = #tpu.pipeline_mode<synchronous>, transform_indices = @transform_2, window_bounds = array<i64: 8, 128>}]} {
    %c0 = arith.constant 0 : index
    %c0_0 = arith.constant 0 : index
    %0 = vector.load %arg1[%c0, %c0_0] : memref<8x8xf32, #tpu.memory_space<vmem>>, vector<8x8xf32>
    %1 = arith.truncf %0 : vector<8x8xf32> to vector<8x8xbf16>
    %c0_1 = arith.constant 0 : index
    %c0_2 = arith.constant 0 : index
    %2 = vector.load %arg2[%c0_1, %c0_2] : memref<8x128xf32, #tpu.memory_space<vmem>>, vector<8x128xf32>
    %3 = arith.truncf %2 : vector<8x128xf32> to vector<8x128xbf16>
    %cst = arith.constant dense<0.000000e+00> : vector<8x128xf32>
    %4 = tpu.matmul %1, %3, %cst {dimension_numbers = #tpu.dot_dimension_numbers<[0], [0], [1], [1], [0, 1, 1, 1], [], []>} : vector<8x8xbf16>, vector<8x128xbf16>, vector<8x128xf32> -> vector<8x128xf32>
    %cst_3 = arith.constant 2.000000e+01 : f32
    %5 = vector.broadcast %cst_3 : f32 to vector<8x128xf32>
    %6 = arith.mulf %4, %5 : vector<8x128xf32>
    %c0_i32 = arith.constant 0 : i32
    %7 = arith.cmpi eq, %arg0, %c0_i32 : i32
    %8 = arith.extui %7 : i1 to i32
    %c0_i32_4 = arith.constant 0 : i32
    %9 = arith.cmpi ne, %8, %c0_i32_4 : i32
    scf.if %9 {
      %cst_9 = arith.constant 0.000000e+00 : f32
      %13 = vector.broadcast %cst_9 : f32 to vector<8x128xf32>
      %c0_10 = arith.constant 0 : index
      %c0_11 = arith.constant 0 : index
      %14 = vector.load %arg3[%c0_10, %c0_11] : memref<8x128xf32, #tpu.memory_space<vmem>>, vector<8x128xf32>
      tpu.vector_store %arg3[%c0_10, %c0_11], %13 {strides = array<i32>} : memref<8x128xf32, #tpu.memory_space<vmem>>, vector<8x128xf32>,
    } else {
    }
    %c0_5 = arith.constant 0 : index
    %c0_6 = arith.constant 0 : index
    %10 = vector.load %arg3[%c0_5, %c0_6] : memref<8x128xf32, #tpu.memory_space<vmem>>, vector<8x128xf32>
    %11 = arith.addf %10, %6 : vector<8x128xf32>
    %c0_7 = arith.constant 0 : index
    %c0_8 = arith.constant 0 : index
    %12 = vector.load %arg3[%c0_7, %c0_8] : memref<8x128xf32, #tpu.memory_space<vmem>>, vector<8x128xf32>
    tpu.vector_store %arg3[%c0_7, %c0_8], %11 {strides = array<i32>} : memref<8x128xf32, #tpu.memory_space<vmem>>, vector<8x128xf32>,
    return
  }
  func.func @transform_0(%arg0: i32) -> (i32, i32) {
    %c0_i32 = arith.constant 0 : i32
    %c0_i32_0 = arith.constant 0 : i32
    return %arg0, %c0_i32 : i32, i32
  }
  func.func @transform_1(%arg0: i32) -> (i32, i32) {
    %c0_i32 = arith.constant 0 : i32
    %c0_i32_0 = arith.constant 0 : i32
    return %arg0, %c0_i32 : i32, i32
  }
  func.func @transform_2(%arg0: i32) -> (i32, i32) {
    %c0_i32 = arith.constant 0 : i32
    %c0_i32_0 = arith.constant 0 : i32
    %c0_i32_1 = arith.constant 0 : i32
    return %c0_i32, %c0_i32_0 : i32, i32
  }
}

module attributes {stable_mosaic.version = 11 : i64} {
  func.func @_head_dx_kernel(%arg0: i32, %arg1: memref<8x128xf32, #tpu.memory_space<vmem>>, %arg2: memref<128x128xf32, #tpu.memory_space<vmem>>, %arg3: memref<128x128xf32, #tpu.memory_space<vmem>>, %arg4: memref<8x128xf32, #tpu.memory_space<vmem>>, %arg5: memref<8x128xf32, #tpu.memory_space<vmem>>, %arg6: memref<8x1xf32, #tpu.memory_space<vmem>>, %arg7: memref<8x128xf32, #tpu.memory_space<vmem>>) attributes {dimension_semantics = [#tpu.dimension_semantics<parallel>], iteration_bounds = array<i64: 1>, scalar_prefetch = 0 : i64, scratch_operands = 0 : i64, tpu.core_type = #tpu.core_type<tc>, window_params = [{transform_indices = @transform_0, window_bounds = array<i64: 8, 128>}, {pipeline_mode = #tpu.pipeline_mode<synchronous>, transform_indices = @transform_1, window_bounds = array<i64: 128, 128>}, {pipeline_mode = #tpu.pipeline_mode<synchronous>, transform_indices = @transform_2, window_bounds = array<i64: 128, 128>}, {transform_indices = @transform_3, window_bounds = array<i64: 8, 128>}, {transform_indices = @transform_4, window_bounds = array<i64: 8, 128>}, {transform_indices = @transform_5, window_bounds = array<i64: 8, 1>}, {transform_indices = @transform_6, window_bounds = array<i64: 8, 128>}]} {
    %c0 = arith.constant 0 : index
    %c0_0 = arith.constant 0 : index
    %0 = vector.load %arg1[%c0, %c0_0] : memref<8x128xf32, #tpu.memory_space<vmem>>, vector<8x128xf32>
    %c0_1 = arith.constant 0 : index
    %c0_2 = arith.constant 0 : index
    %1 = vector.load %arg5[%c0_1, %c0_2] : memref<8x128xf32, #tpu.memory_space<vmem>>, vector<8x128xf32>
    %c0_3 = arith.constant 0 : index
    %c0_4 = arith.constant 0 : index
    %2 = vector.load %arg6[%c0_3, %c0_4] : memref<8x1xf32, #tpu.memory_space<vmem>>, vector<8x1xf32>
    %c0_5 = arith.constant 0 : index
    %c0_6 = arith.constant 0 : index
    %3 = vector.load %arg4[%c0_5, %c0_6] : memref<8x128xf32, #tpu.memory_space<vmem>>, vector<8x128xf32>
    %c0_7 = arith.constant 0 : index
    %c0_8 = arith.constant 0 : index
    %4 = vector.load %arg3[%c0_7, %c0_8] : memref<128x128xf32, #tpu.memory_space<vmem>>, vector<128x128xf32>
    %5 = arith.truncf %4 : vector<128x128xf32> to vector<128x128xbf16>
    %6 = arith.mulf %0, %1 : vector<8x128xf32>
    %cst = arith.constant dense<0.000000e+00> : vector<8xf32>
    %7 = vector.multi_reduction <add>, %6, %cst [1] : vector<8x128xf32> to vector<8xf32>
    %8 = vector.shape_cast %7 : vector<8xf32> to vector<8x1xf32>
    %9 = vector.broadcast %8 : vector<8x1xf32> to vector<8x128xf32>
    %10 = arith.mulf %9, %1 : vector<8x128xf32>
    %11 = arith.subf %0, %10 : vector<8x128xf32>
    %12 = vector.broadcast %2 : vector<8x1xf32> to vector<8x128xf32>
    %13 = arith.mulf %11, %12 : vector<8x128xf32>
    %14 = arith.truncf %13 : vector<8x128xf32> to vector<8x128xbf16>
    %cst_9 = arith.constant dense<0.000000e+00> : vector<8x128xf32>
    %15 = tpu.matmul %14, %5, %cst_9 {dimension_numbers = #tpu.dot_dimension_numbers<[1], [1], [0], [0], [0, 0, 1, 0], [], []>} : vector<8x128xbf16>, vector<128x128xbf16>, vector<8x128xf32> -> vector<8x128xf32>
    %cst_10 = arith.constant 0.000000e+00 : f32
    %16 = vector.broadcast %cst_10 : f32 to vector<8x128xf32>
    %17 = arith.cmpf ogt, %3, %16 : vector<8x128xf32>
    %cst_11 = arith.constant 0.000000e+00 : f32
    %18 = vector.broadcast %cst_11 : f32 to vector<8x128xf32>
    %19 = arith.select %17, %15, %18 : vector<8x128xi1>, vector<8x128xf32>
    %20 = arith.truncf %19 : vector<8x128xf32> to vector<8x128xbf16>
    %c0_12 = arith.constant 0 : index
    %c0_13 = arith.constant 0 : index
    %21 = vector.load %arg2[%c0_12, %c0_13] : memref<128x128xf32, #tpu.memory_space<vmem>>, vector<128x128xf32>
    %22 = arith.truncf %21 : vector<128x128xf32> to vector<128x128xbf16>
    %cst_14 = arith.constant dense<0.000000e+00> : vector<8x128xf32>
    %23 = tpu.matmul %20, %22, %cst_14 {dimension_numbers = #tpu.dot_dimension_numbers<[1], [1], [0], [0], [0, 0, 1, 0], [], []>} : vector<8x128xbf16>, vector<128x128xbf16>, vector<8x128xf32> -> vector<8x128xf32>
    %c0_15 = arith.constant 0 : index
    %c0_16 = arith.constant 0 : index
    %24 = vector.load %arg7[%c0_15, %c0_16] : memref<8x128xf32, #tpu.memory_space<vmem>>, vector<8x128xf32>
    tpu.vector_store %arg7[%c0_15, %c0_16], %23 {strides = array<i32>} : memref<8x128xf32, #tpu.memory_space<vmem>>, vector<8x128xf32>,
    return
  }
  func.func @transform_0(%arg0: i32) -> (i32, i32) {
    %c0_i32 = arith.constant 0 : i32
    %c0_i32_0 = arith.constant 0 : i32
    return %arg0, %c0_i32 : i32, i32
  }
  func.func @transform_1(%arg0: i32) -> (i32, i32) {
    %c0_i32 = arith.constant 0 : i32
    %c0_i32_0 = arith.constant 0 : i32
    %c0_i32_1 = arith.constant 0 : i32
    return %c0_i32, %c0_i32_0 : i32, i32
  }
  func.func @transform_2(%arg0: i32) -> (i32, i32) {
    %c0_i32 = arith.constant 0 : i32
    %c0_i32_0 = arith.constant 0 : i32
    %c0_i32_1 = arith.constant 0 : i32
    return %c0_i32, %c0_i32_0 : i32, i32
  }
  func.func @transform_3(%arg0: i32) -> (i32, i32) {
    %c0_i32 = arith.constant 0 : i32
    %c0_i32_0 = arith.constant 0 : i32
    return %arg0, %c0_i32 : i32, i32
  }
  func.func @transform_4(%arg0: i32) -> (i32, i32) {
    %c0_i32 = arith.constant 0 : i32
    %c0_i32_0 = arith.constant 0 : i32
    return %arg0, %c0_i32 : i32, i32
  }
  func.func @transform_5(%arg0: i32) -> (i32, i32) {
    %c0_i32 = arith.constant 0 : i32
    %c0_i32_0 = arith.constant 0 : i32
    return %arg0, %c0_i32 : i32, i32
  }
  func.func @transform_6(%arg0: i32) -> (i32, i32) {
    %c0_i32 = arith.constant 0 : i32
    %c0_i32_0 = arith.constant 0 : i32
    return %arg0, %c0_i32 : i32, i32
  }
}

module attributes {stable_mosaic.version = 11 : i64} {
  func.func @_l2norm_kernel(%arg0: i32, %arg1: memref<8x128xf32, #tpu.memory_space<vmem>>, %arg2: memref<8x128xf32, #tpu.memory_space<vmem>>) attributes {dimension_semantics = [#tpu.dimension_semantics<parallel>], iteration_bounds = array<i64: 1>, scalar_prefetch = 0 : i64, scratch_operands = 0 : i64, tpu.core_type = #tpu.core_type<tc>, window_params = [{transform_indices = @transform_0, window_bounds = array<i64: 8, 128>}, {transform_indices = @transform_1, window_bounds = array<i64: 8, 128>}]} {
    %c0 = arith.constant 0 : index
    %c0_0 = arith.constant 0 : index
    %0 = vector.load %arg1[%c0, %c0_0] : memref<8x128xf32, #tpu.memory_space<vmem>>, vector<8x128xf32>
    %cst = arith.constant 0.000000e+00 : f32
    %1 = vector.broadcast %cst : f32 to vector<8x128xf32>
    %2 = arith.subf %0, %1 : vector<8x128xf32>
    %3 = arith.mulf %2, %2 : vector<8x128xf32>
    %cst_1 = arith.constant dense<0.000000e+00> : vector<8xf32>
    %4 = vector.multi_reduction <add>, %3, %cst_1 [1] : vector<8x128xf32> to vector<8xf32>
    %5 = vector.shape_cast %4 : vector<8xf32> to vector<8x1xf32>
    %6 = math.sqrt %5 : vector<8x1xf32>
    %cst_2 = arith.constant 9.99999993E-9 : f32
    %7 = vector.broadcast %cst_2 : f32 to vector<8x1xf32>
    %8 = arith.addf %6, %7 : vector<8x1xf32>
    %9 = tpu.reciprocal %8 {approx = true} : vector<8x1xf32> -> vector<8x1xf32>
    %10 = vector.broadcast %9 : vector<8x1xf32> to vector<8x128xf32>
    %11 = arith.mulf %2, %10 : vector<8x128xf32>
    %c0_3 = arith.constant 0 : index
    %c0_4 = arith.constant 0 : index
    %12 = vector.load %arg2[%c0_3, %c0_4] : memref<8x128xf32, #tpu.memory_space<vmem>>, vector<8x128xf32>
    tpu.vector_store %arg2[%c0_3, %c0_4], %11 {strides = array<i32>} : memref<8x128xf32, #tpu.memory_space<vmem>>, vector<8x128xf32>,
    return
  }
  func.func @transform_0(%arg0: i32) -> (i32, i32) {
    %c0_i32 = arith.constant 0 : i32
    %c0_i32_0 = arith.constant 0 : i32
    return %arg0, %c0_i32 : i32, i32
  }
  func.func @transform_1(%arg0: i32) -> (i32, i32) {
    %c0_i32 = arith.constant 0 : i32
    %c0_i32_0 = arith.constant 0 : i32
    return %arg0, %c0_i32 : i32, i32
  }
}

module attributes {stable_mosaic.version = 11 : i64} {
  func.func @_head_fwd_kernel(%arg0: i32, %arg1: memref<8x128xf32, #tpu.memory_space<vmem>>, %arg2: memref<128x128xf32, #tpu.memory_space<vmem>>, %arg3: memref<128x128xf32, #tpu.memory_space<vmem>>, %arg4: memref<8x128xf32, #tpu.memory_space<vmem>>, %arg5: memref<8x128xf32, #tpu.memory_space<vmem>>, %arg6: memref<8x1xf32, #tpu.memory_space<vmem>>) attributes {dimension_semantics = [#tpu.dimension_semantics<parallel>], iteration_bounds = array<i64: 1>, scalar_prefetch = 0 : i64, scratch_operands = 0 : i64, tpu.core_type = #tpu.core_type<tc>, window_params = [{transform_indices = @transform_0, window_bounds = array<i64: 8, 128>}, {pipeline_mode = #tpu.pipeline_mode<synchronous>, transform_indices = @transform_1, window_bounds = array<i64: 128, 128>}, {pipeline_mode = #tpu.pipeline_mode<synchronous>, transform_indices = @transform_2, window_bounds = array<i64: 128, 128>}, {transform_indices = @transform_3, window_bounds = array<i64: 8, 128>}, {transform_indices = @transform_4, window_bounds = array<i64: 8, 128>}, {transform_indices = @transform_5, window_bounds = array<i64: 8, 1>}]} {
    %c0 = arith.constant 0 : index
    %c0_0 = arith.constant 0 : index
    %0 = vector.load %arg1[%c0, %c0_0] : memref<8x128xf32, #tpu.memory_space<vmem>>, vector<8x128xf32>
    %1 = arith.truncf %0 : vector<8x128xf32> to vector<8x128xbf16>
    %c0_1 = arith.constant 0 : index
    %c0_2 = arith.constant 0 : index
    %2 = vector.load %arg2[%c0_1, %c0_2] : memref<128x128xf32, #tpu.memory_space<vmem>>, vector<128x128xf32>
    %3 = arith.truncf %2 : vector<128x128xf32> to vector<128x128xbf16>
    %c0_3 = arith.constant 0 : index
    %c0_4 = arith.constant 0 : index
    %4 = vector.load %arg3[%c0_3, %c0_4] : memref<128x128xf32, #tpu.memory_space<vmem>>, vector<128x128xf32>
    %5 = arith.truncf %4 : vector<128x128xf32> to vector<128x128xbf16>
    %cst = arith.constant dense<0.000000e+00> : vector<8x128xf32>
    %6 = tpu.matmul %1, %3, %cst {dimension_numbers = #tpu.dot_dimension_numbers<[1], [0], [0], [1], [0, 0, 1, 1], [], []>} : vector<8x128xbf16>, vector<128x128xbf16>, vector<8x128xf32> -> vector<8x128xf32>
    %cst_5 = arith.constant 0.000000e+00 : f32
    %7 = vector.broadcast %cst_5 : f32 to vector<8x128xf32>
    %8 = arith.maximumf %6, %7 : vector<8x128xf32>
    %9 = arith.truncf %8 : vector<8x128xf32> to vector<8x128xbf16>
    %cst_6 = arith.constant dense<0.000000e+00> : vector<8x128xf32>
    %10 = tpu.matmul %9, %5, %cst_6 {dimension_numbers = #tpu.dot_dimension_numbers<[1], [0], [0], [1], [0, 0, 1, 1], [], []>} : vector<8x128xbf16>, vector<128x128xbf16>, vector<8x128xf32> -> vector<8x128xf32>
    %11 = arith.mulf %10, %10 : vector<8x128xf32>
    %cst_7 = arith.constant dense<0.000000e+00> : vector<8xf32>
    %12 = vector.multi_reduction <add>, %11, %cst_7 [1] : vector<8x128xf32> to vector<8xf32>
    %13 = vector.shape_cast %12 : vector<8xf32> to vector<8x1xf32>
    %14 = math.sqrt %13 : vector<8x1xf32>
    %cst_8 = arith.constant 9.99999993E-9 : f32
    %15 = vector.broadcast %cst_8 : f32 to vector<8x1xf32>
    %16 = arith.addf %14, %15 : vector<8x1xf32>
    %17 = tpu.reciprocal %16 {approx = true} : vector<8x1xf32> -> vector<8x1xf32>
    %18 = vector.broadcast %17 : vector<8x1xf32> to vector<8x128xf32>
    %19 = arith.mulf %10, %18 : vector<8x128xf32>
    %c0_9 = arith.constant 0 : index
    %c0_10 = arith.constant 0 : index
    %20 = vector.load %arg4[%c0_9, %c0_10] : memref<8x128xf32, #tpu.memory_space<vmem>>, vector<8x128xf32>
    tpu.vector_store %arg4[%c0_9, %c0_10], %19 {strides = array<i32>} : memref<8x128xf32, #tpu.memory_space<vmem>>, vector<8x128xf32>,
    %c0_11 = arith.constant 0 : index
    %c0_12 = arith.constant 0 : index
    %21 = vector.load %arg5[%c0_11, %c0_12] : memref<8x128xf32, #tpu.memory_space<vmem>>, vector<8x128xf32>
    tpu.vector_store %arg5[%c0_11, %c0_12], %8 {strides = array<i32>} : memref<8x128xf32, #tpu.memory_space<vmem>>, vector<8x128xf32>,
    %c0_13 = arith.constant 0 : index
    %c0_14 = arith.constant 0 : index
    %22 = vector.load %arg6[%c0_13, %c0_14] : memref<8x1xf32, #tpu.memory_space<vmem>>, vector<8x1xf32>
    tpu.vector_store %arg6[%c0_13, %c0_14], %17 {strides = array<i32>} : memref<8x1xf32, #tpu.memory_space<vmem>>, vector<8x1xf32>,
    return
  }
  func.func @transform_0(%arg0: i32) -> (i32, i32) {
    %c0_i32 = arith.constant 0 : i32
    %c0_i32_0 = arith.constant 0 : i32
    return %arg0, %c0_i32 : i32, i32
  }
  func.func @transform_1(%arg0: i32) -> (i32, i32) {
    %c0_i32 = arith.constant 0 : i32
    %c0_i32_0 = arith.constant 0 : i32
    %c0_i32_1 = arith.constant 0 : i32
    return %c0_i32, %c0_i32_0 : i32, i32
  }
  func.func @transform_2(%arg0: i32) -> (i32, i32) {
    %c0_i32 = arith.constant 0 : i32
    %c0_i32_0 = arith.constant 0 : i32
    %c0_i32_1 = arith.constant 0 : i32
    return %c0_i32, %c0_i32_0 : i32, i32
  }
  func.func @transform_3(%arg0: i32) -> (i32, i32) {
    %c0_i32 = arith.constant 0 : i32
    %c0_i32_0 = arith.constant 0 : i32
    return %arg0, %c0_i32 : i32, i32
  }
  func.func @transform_4(%arg0: i32) -> (i32, i32) {
    %c0_i32 = arith.constant 0 : i32
    %c0_i32_0 = arith.constant 0 : i32
    return %arg0, %c0_i32 : i32, i32
  }
  func.func @transform_5(%arg0: i32) -> (i32, i32) {
    %c0_i32 = arith.constant 0 : i32
    %c0_i32_0 = arith.constant 0 : i32
    return %arg0, %c0_i32 : i32, i32
  }
}

</mosaic_0001>

<llo_original>
// kernel: vascl_pturb_forward.6
$region0: #{vascl_pturb_forward.6}
  #allocation0 [shape = 'u32[]', space=smem, size = 0x4, offset = 0x4, fixed_abs, tag = 'smem constant byte address 0x4 - core index']
  #allocation1 [shape = 'u32[144,128]{1,0:T(1,128)}', space=vmem, size = 0x12000, scoped, tag = 'internal scratch']
  %s0 = inlined_call_operand.vmem [shape: f32[8,128], index: 0, kind: input, shape index: {}]
  %s1 = inlined_call_operand.vmem [shape: f32[8,128], index: 1, kind: output, shape index: {}]
  %s2 = sld [smem:[#allocation0]]
  $region14: #{vascl_pturb_forward.6} parent=0
    _
  %s4 = ssub.s32 1, %s2
  %s5 = scalar_select 0, %s4, %s2
  // Predicated region
  $region2: #{vascl_pturb_forward.6} parent=0 // pred_check
    _
  $region3: #{vascl_pturb_forward.6} parent=0 // pred_check_branch
    %7 = sbr.rel (0) target = $region5
  $region4: #{vascl_pturb_forward.6} parent=0 // pred_region
    _
  $region5: #{vascl_pturb_forward.6} parent=0 // pred_fallthru
    _
  %v8 = vld [vmem:[%s0] sm:$0xff]
  %v9 = vsub.f32 %v8, 0.5
  %v10 = vmul.f32 %v9, %v9
  %11 = vadd.xlane.f32.xlu0 %v10
  %v12 = vpop.xlane.xlu0 %11
  %v13 = vrsqrt.pop %v12
  %v14 = vmul.f32 %v12, %v13
  %vm15 = vcmp.eq.f32.partialorder %v12, inf
  %v16 = vsel %vm15, %v12, %v14
  %vm17 = vcmp.eq.f32.partialorder %v12, 0.0
  %v18 = vand.u32 %v12, 2147483648
  %v19 = vsel %vm17, %v18, %v16
  %v20 = vadd.f32 %v19, 1e-08
  %v21 = vrcp.pop %v20
  %v22 = vmul.f32 %v9, %v21
  %23 = vst [vmem:[%s1] sm:$0xff] %v22
  // Predicated region
  $region6: #{vascl_pturb_forward.6} parent=0 // pred_check
    _
  $region7: #{vascl_pturb_forward.6} parent=0 // pred_check_branch
    %25 = sbr.rel (0) target = $region9
  $region8: #{vascl_pturb_forward.6} parent=0 // pred_region
    _
  $region9: #{vascl_pturb_forward.6} parent=0 // pred_fallthru
    _
  // Predicated region
  $region10: #{vascl_pturb_forward.6} parent=0 // pred_check
    _
  $region11: #{vascl_pturb_forward.6} parent=0 // pred_check_branch
    %27 = sbr.rel (0) target = $region13
  $region12: #{vascl_pturb_forward.6} parent=0 // pred_region
    _
  $region13: #{vascl_pturb_forward.6} parent=0 // pred_fallthru
    _

// kernel: jvp__.3
$region0: #{jvp__.3}
  #allocation0 [shape = 'u32[]', space=smem, size = 0x4, offset = 0x4, fixed_abs, tag = 'smem constant byte address 0x4 - core index']
  #allocation1 [shape = 'u32[144,128]{1,0:T(1,128)}', space=vmem, size = 0x12000, scoped, tag = 'internal scratch']
  %s0 = inlined_call_operand.vmem [shape: f32[8,128], index: 0, kind: input, shape index: {}]
  %s1 = inlined_call_operand.vmem [shape: f32[8,128], index: 1, kind: input, shape index: {}]
  %s2 = inlined_call_operand.vmem [shape: f32[8,8], index: 2, kind: output, shape index: {}]
  %s3 = sld [smem:[#allocation0]]
  $region18: #{jvp__.3} parent=0
    _
  %s5 = ssub.s32 1, %s3
  %s6 = scalar_select 0, %s5, %s3
  // Predicated region
  $region2: #{jvp__.3} parent=0 // pred_check
    _
  $region3: #{jvp__.3} parent=0 // pred_check_branch
    %8 = sbr.rel (0) target = $region5
  $region4: #{jvp__.3} parent=0 // pred_region
    _
  $region5: #{jvp__.3} parent=0 // pred_fallthru
    _
  // Predicated region
  $region6: #{jvp__.3} parent=0 // pred_check
    _
  $region7: #{jvp__.3} parent=0 // pred_check_branch
    %10 = sbr.rel (0) target = $region9
  $region8: #{jvp__.3} parent=0 // pred_region
    _
  $region9: #{jvp__.3} parent=0 // pred_fallthru
    _
  %v12 = vld [vmem:[%s0] sm:$0xff]
  %v13 = vpack.c.bf16 %v12, %v12
  %v14 = vld [vmem:[%s1] sm:$0xff]
  %v15 = vpack.c.bf16 %v14, %v14
  %16 = vmatprep.subr.bf16.mxu0 0
  %17 = vmatpush1.bf16.xpose.msra.mxu0 %v15
  %18 = vmatprep.subr.bf16.mxu0 0
  %19 = vmatpush1.bf16.xpose.msra.mxu0 0
  %20 = vmatprep.subr.bf16.mxu0 0
  %21 = vmatpush1.bf16.xpose.msra.mxu0 0
  %22 = vmatprep.subr.bf16.mxu0 0
  %23 = vmatpush1.bf16.xpose.msra.mxu0 0
  %24 = vmatprep.subr.bf16.mxu0 0
  %25 = vmatpush1.bf16.xpose.msra.mxu0 0
  %26 = vmatprep.subr.bf16.mxu0 0
  %27 = vmatpush1.bf16.xpose.msra.mxu0 0
  %28 = vmatprep.subr.bf16.mxu0 0
  %29 = vmatpush1.bf16.xpose.msra.mxu0 0
  %30 = vmatprep.subr.bf16.mxu0 0
  %31 = vmatpush1.bf16.xpose.msra.mxu0 0
  %32 = vmatprep.subr.bf16.mxu0 0
  %33 = vmatpush1.bf16.xpose.msra.mxu0 0
  %34 = vmatprep.subr.bf16.mxu0 0
  %35 = vmatpush1.bf16.xpose.msra.mxu0 0
  %36 = vmatprep.subr.bf16.mxu0 0
  %37 = vmatpush1.bf16.xpose.msra.mxu0 0
  %38 = vmatprep.subr.bf16.mxu0 0
  %39 = vmatpush1.bf16.xpose.msra.mxu0 0
  %40 = vmatprep.subr.bf16.mxu0 0
  %41 = vmatpush1.bf16.xpose.msra.mxu0 0
  %42 = vmatprep.subr.bf16.mxu0 0
  %43 = vmatpush1.bf16.xpose.msra.mxu0 0
  %44 = vmatprep.subr.bf16.mxu0 0
  %45 = vmatpush1.bf16.xpose.msra.mxu0 0
  %46 = vmatprep.subr.bf16.mxu0 0
  %47 = vmatpush1.bf16.xpose.msra.mxu0 0
  %48 = vmatprep.mubr.bf16.mxu0 0
  %49 = vmatmul.mubr.bf16.gmra.mrb[0].mxu0 %v13
  %v50 = vpop.f32.mrb[0].mxu0
  %v51 = vadd.f32 0.0, %v50
  %v52 = vpop.f32.mrb[0].mxu0
  %v53 = vpop.f32.mrb[0].mxu0
  %v54 = vpop.f32.mrb[0].mxu0
  %55 = vdwg.mxu0
  %v56 = vmul.f32 %v51, 20.0
  %vm57 = vcmask 64512
  %58 = vst.msk [vmem:[%s2] sm:$0xff] %vm57, %v56
  // Predicated region
  $region10: #{jvp__.3} parent=0 // pred_check
    _
  $region11: #{jvp__.3} parent=0 // pred_check_branch
    %60 = sbr.rel (0) target = $region13
  $region12: #{jvp__.3} parent=0 // pred_region
    _
  $region13: #{jvp__.3} parent=0 // pred_fallthru
    _
  // Predicated region
  $region14: #{jvp__.3} parent=0 // pred_check
    _
  $region15: #{jvp__.3} parent=0 // pred_check_branch
    %62 = sbr.rel (0) target = $region17
  $region16: #{jvp__.3} parent=0 // pred_region
    _
  $region17: #{jvp__.3} parent=0 // pred_fallthru
    _

// kernel: vascl_pturb_forward.5
$region0: #{vascl_pturb_forward.5}
  #allocation0 [shape = 'u32[]', space=smem, size = 0x4, offset = 0x4, fixed_abs, tag = 'smem constant byte address 0x4 - core index']
  #allocation1 [shape = 'u32[144,128]{1,0:T(1,128)}', space=vmem, size = 0x12000, scoped, tag = 'internal scratch']
  %s0 = inlined_call_operand.vmem [shape: f32[8,128], index: 0, kind: input, shape index: {}]
  %s1 = inlined_call_operand.hbm [shape: f32[128,128], index: 1, kind: input, shape index: {}]
  %s2 = inlined_call_operand.hbm [shape: f32[128,128], index: 2, kind: input, shape index: {}]
  %s3 = inlined_call_operand.vmem [shape: f32[8,128], index: 3, kind: output, shape index: {0}]
  %s4 = inlined_call_operand.hbm [shape: f32[8,128], index: 4, kind: output, shape index: {1}]
  %s5 = inlined_call_operand.hbm [shape: f32[8,1], index: 5, kind: output, shape index: {2}]
  %6 = xla_tuple %s3, %s4, %s5
  %s7 = sld [smem:[#allocation0]]
  $region46: #{vascl_pturb_forward.5} parent=0
    _
  %s9 = ssub.s32 1, %s7
  %s10 = scalar_select 0, %s9, %s7
  $region1: #{vascl_pturb_forward.5} parent=0
    #allocation2 [shape = 'u8[65536]{0}', space=vmem, size = 0x10000, scoped, tag = 'input window, operand 1, single buffered']
    #allocation3 [shape = 's32[1]{0}', space=sflag, size = 0x4, scoped, tag = 'scoped memory for vascl_pturb_forward.5']
    #allocation4 [shape = 's32[1]{0}', space=sflag, size = 0x4, scoped, tag = 'scoped memory for vascl_pturb_forward.5']
    #allocation5 [shape = 'u8[65536]{0}', space=vmem, size = 0x10000, scoped, tag = 'input window, operand 2, single buffered']
    #allocation6 [shape = 's32[1]{0}', space=sflag, size = 0x4, scoped, tag = 'scoped memory for vascl_pturb_forward.5']
    #allocation7 [shape = 'u8[4096]{0}', space=vmem, size = 0x1000, scoped, tag = 'output window, operand 1, single buffered']
    #allocation8 [shape = 'u8[4096]{0}', space=vmem, size = 0x1000, scoped, tag = 'output window, operand 2, single buffered']
    #allocation9 [shape = 's32[1]{0}', space=sflag, size = 0x4, scoped, tag = 'scoped memory for vascl_pturb_forward.5']
    %11 = vsyncpa [#allocation3], 0
    %12 = vsyncpa [#allocation6], 0
    %13 = vsyncpa [#allocation4], 0
    %14 = vsyncpa [#allocation9], 0
    // Predicated region
    $region2: #{vascl_pturb_forward.5} parent=1 // pred_check
      _
    $region3: #{vascl_pturb_forward.5} parent=1 // pred_check_branch
      %16 = sbr.rel (0) target = $region5
    $region4: #{vascl_pturb_forward.5} parent=1 // pred_region
      _
    $region5: #{vascl_pturb_forward.5} parent=1 // pred_fallthru
      _
    // Predicated region
    $region6: #{vascl_pturb_forward.5} parent=1 // pred_check
      _
    $region7: #{vascl_pturb_forward.5} parent=1 // pred_check_branch
      %18 = sbr.rel (0) target = $region9
    $region8: #{vascl_pturb_forward.5} parent=1 // pred_region
      %s20 = ssub.s32 2048, 2048
      %21 = vsyncadd [#allocation3], %s20
      %s22 = sshll.u32 [#allocation2], 4
      %s23 = int_to_ptr.vmem [resolvable:$true] %s22
      %28 = dma.hbm_to_vmem [thread:$0]  %s1, 2048, %s23, [#allocation3], 128, 128, 8
    $region9: #{vascl_pturb_forward.5} parent=1 // pred_fallthru
      _
    // Predicated region
    $region10: #{vascl_pturb_forward.5} parent=1 // pred_check
      _
    $region11: #{vascl_pturb_forward.5} parent=1 // pred_check_branch
      %30 = sbr.rel (0) target = $region13
    $region12: #{vascl_pturb_forward.5} parent=1 // pred_region
      %s32 = ssub.s32 2048, 2048
      %33 = vsyncadd [#allocation6], %s32
      %s34 = sshll.u32 [#allocation5], 4
      %s35 = int_to_ptr.vmem [resolvable:$true] %s34
      %40 = dma.hbm_to_vmem [thread:$0]  %s2, 2048, %s35, [#allocation6], 128, 128, 8
    $region13: #{vascl_pturb_forward.5} parent=1 // pred_fallthru
      _
    // Predicated region
    $region14: #{vascl_pturb_forward.5} parent=1 // pred_check
      _
    $region15: #{vascl_pturb_forward.5} parent=1 // pred_check_branch
      %42 = sbr.rel (0) target = $region17
    $region16: #{vascl_pturb_forward.5} parent=1 // pred_region
      %43 = dma.done [#allocation3], 2048
    $region17: #{vascl_pturb_forward.5} parent=1 // pred_fallthru
      _
    // Predicated region
    $region18: #{vascl_pturb_forward.5} parent=1 // pred_check
      _
    $region19: #{vascl_pturb_forward.5} parent=1 // pred_check_branch
      %45 = sbr.rel (0) target = $region21
    $region20: #{vascl_pturb_forward.5} parent=1 // pred_region
      %46 = dma.done [#allocation6], 2048
    $region21: #{vascl_pturb_forward.5} parent=1 // pred_fallthru
      _
    %v48 = vld [vmem:[%s0] sm:$0xff]
    %v49 = vpack.c.bf16 %v48, %v48
    %v50 = vld [vmem:[#allocation2] sm:$0xff]
    %v51 = vld [vmem:[#allocation2 + $0x8] sm:$0xff]
    %v52 = vld [vmem:[#allocation2 + $0x10] sm:$0xff]
    %v53 = vld [vmem:[#allocation2 + $0x18] sm:$0xff]
    %v54 = vld [vmem:[#allocation2 + $0x20] sm:$0xff]
    %v55 = vld [vmem:[#allocation2 + $0x28] sm:$0xff]
    %v56 = vld [vmem:[#allocation2 + $0x30] sm:$0xff]
    %v57 = vld [vmem:[#allocation2 + $0x38] sm:$0xff]
    %v58 = vld [vmem:[#allocation2 + $0x40] sm:$0xff]
    %v59 = vld [vmem:[#allocation2 + $0x48] sm:$0xff]
    %v60 = vld [vmem:[#allocation2 + $0x50] sm:$0xff]
    %v61 = vld [vmem:[#allocation2 + $0x58] sm:$0xff]
    %v62 = vld [vmem:[#allocation2 + $0x60] sm:$0xff]
    %v63 = vld [vmem:[#allocation2 + $0x68] sm:$0xff]
    %v64 = vld [vmem:[#allocation2 + $0x70] sm:$0xff]
    %v65 = vld [vmem:[#allocation2 + $0x78] sm:$0xff]
    %v66 = vpack.c.bf16 %v51, %v50
    %v67 = vpack.c.bf16 %v53, %v52
    %v68 = vpack.c.bf16 %v55, %v54
    %v69 = vpack.c.bf16 %v57, %v56
    %v70 = vpack.c.bf16 %v59, %v58
    %v71 = vpack.c.bf16 %v61, %v60
    %v72 = vpack.c.bf16 %v63, %v62
    %v73 = vpack.c.bf16 %v65, %v64
    %v74 = vld [vmem:[#allocation5] sm:$0xff]
    %v75 = vld [vmem:[#allocation5 + $0x8] sm:$0xff]
    %v76 = vld [vmem:[#allocation5 + $0x10] sm:$0xff]
    %v77 = vld [vmem:[#allocation5 + $0x18] sm:$0xff]
    %v78 = vld [vmem:[#allocation5 + $0x20] sm:$0xff]
    %v79 = vld [vmem:[#allocation5 + $0x28] sm:$0xff]
    %v80 = vld [vmem:[#allocation5 + $0x30] sm:$0xff]
    %v81 = vld [vmem:[#allocation5 + $0x38] sm:$0xff]
    %v82 = vld [vmem:[#allocation5 + $0x40] sm:$0xff]
    %v83 = vld [vmem:[#allocation5 + $0x48] sm:$0xff]
    %v84 = vld [vmem:[#allocation5 + $0x50] sm:$0xff]
    %v85 = vld [vmem:[#allocation5 + $0x58] sm:$0xff]
    %v86 = vld [vmem:[#allocation5 + $0x60] sm:$0xff]
    %v87 = vld [vmem:[#allocation5 + $0x68] sm:$0xff]
    %v88 = vld [vmem:[#allocation5 + $0x70] sm:$0xff]
    %v89 = vld [vmem:[#allocation5 + $0x78] sm:$0xff]
    %v90 = vpack.c.bf16 %v75, %v74
    %v91 = vpack.c.bf16 %v77, %v76
    %v92 = vpack.c.bf16 %v79, %v78
    %v93 = vpack.c.bf16 %v81, %v80
    %v94 = vpack.c.bf16 %v83, %v82
    %v95 = vpack.c.bf16 %v85, %v84
    %v96 = vpack.c.bf16 %v87, %v86
    %v97 = vpack.c.bf16 %v89, %v88
    %98 = vmatprep.subr.bf16.mxu0 0
    %99 = vmatpush1.bf16.msra.mxu0 %v66
    %100 = vmatprep.subr.bf16.mxu0 0
    %101 = vmatpush1.bf16.msra.mxu0 %v67
    %102 = vmatprep.subr.bf16.mxu0 0
    %103 = vmatpush1.bf16.msra.mxu0 %v68
    %104 = vmatprep.subr.bf16.mxu0 0
    %105 = vmatpush1.bf16.msra.mxu0 %v69
    %106 = vmatprep.subr.bf16.mxu0 0
    %107 = vmatpush1.bf16.msra.mxu0 %v70
    %108 = vmatprep.subr.bf16.mxu0 0
    %109 = vmatpush1.bf16.msra.mxu0 %v71
    %110 = vmatprep.subr.bf16.mxu0 0
    %111 = vmatpush1.bf16.msra.mxu0 %v72
    %112 = vmatprep.subr.bf16.mxu0 0
    %113 = vmatpush1.bf16.msra.mxu0 %v73
    %114 = vmatprep.subr.bf16.mxu0 0
    %115 = vmatpush1.bf16.msra.mxu0 0
    %116 = vmatprep.subr.bf16.mxu0 0
    %117 = vmatpush1.bf16.msra.mxu0 0
    %118 = vmatprep.subr.bf16.mxu0 0
    %119 = vmatpush1.bf16.msra.mxu0 0
    %120 = vmatprep.subr.bf16.mxu0 0
    %121 = vmatpush1.bf16.msra.mxu0 0
    %122 = vmatprep.subr.bf16.mxu0 0
    %123 = vmatpush1.bf16.msra.mxu0 0
    %124 = vmatprep.subr.bf16.mxu0 0
    %125 = vmatpush1.bf16.msra.mxu0 0
    %126 = vmatprep.subr.bf16.mxu0 0
    %127 = vmatpush1.bf16.msra.mxu0 0
    %128 = vmatprep.subr.bf16.mxu0 0
    %129 = vmatpush1.bf16.msra.mxu0 0
    %130 = vmatprep.mubr.bf16.mxu0 0
    %131 = vmatmul.mubr.bf16.gmra.mrb[0].mxu0 %v49
    %v132 = vpop.f32.mrb[0].mxu0
    %v133 = vadd.f32 0.0, %v132
    %v134 = vpop.f32.mrb[0].mxu0
    %v135 = vpop.f32.mrb[0].mxu0
    %v136 = vpop.f32.mrb[0].mxu0
    %137 = vdwg.mxu0
    %v138 = vmax.f32 %v133, 0.0
    %v139 = vpack.c.bf16 %v138, %v138
    %140 = vmatprep.subr.bf16.mxu0 0
    %141 = vmatpush1.bf16.msra.mxu0 %v90
    %142 = vmatprep.subr.bf16.mxu0 0
    %143 = vmatpush1.bf16.msra.mxu0 %v91
    %144 = vmatprep.subr.bf16.mxu0 0
    %145 = vmatpush1.bf16.msra.mxu0 %v92
    %146 = vmatprep.subr.bf16.mxu0 0
    %147 = vmatpush1.bf16.msra.mxu0 %v93
    %148 = vmatprep.subr.bf16.mxu0 0
    %149 = vmatpush1.bf16.msra.mxu0 %v94
    %150 = vmatprep.subr.bf16.mxu0 0
    %151 = vmatpush1.bf16.msra.mxu0 %v95
    %152 = vmatprep.subr.bf16.mxu0 0
    %153 = vmatpush1.bf16.msra.mxu0 %v96
    %154 = vmatprep.subr.bf16.mxu0 0
    %155 = vmatpush1.bf16.msra.mxu0 %v97
    %156 = vmatprep.subr.bf16.mxu0 0
    %157 = vmatpush1.bf16.msra.mxu0 0
    %158 = vmatprep.subr.bf16.mxu0 0
    %159 = vmatpush1.bf16.msra.mxu0 0
    %160 = vmatprep.subr.bf16.mxu0 0
    %161 = vmatpush1.bf16.msra.mxu0 0
    %162 = vmatprep.subr.bf16.mxu0 0
    %163 = vmatpush1.bf16.msra.mxu0 0
    %164 = vmatprep.subr.bf16.mxu0 0
    %165 = vmatpush1.bf16.msra.mxu0 0
    %166 = vmatprep.subr.bf16.mxu0 0
    %167 = vmatpush1.bf16.msra.mxu0 0
    %168 = vmatprep.subr.bf16.mxu0 0
    %169 = vmatpush1.bf16.msra.mxu0 0
    %170 = vmatprep.subr.bf16.mxu0 0
    %171 = vmatpush1.bf16.msra.mxu0 0
    %172 = vmatprep.mubr.bf16.mxu0 0
    %173 = vmatmul.mubr.bf16.gmra.mrb[0].mxu0 %v139
    %v174 = vpop.f32.mrb[0].mxu0
    %v175 = vadd.f32 0.0, %v174
    %v176 = vpop.f32.mrb[0].mxu0
    %v177 = vpop.f32.mrb[0].mxu0
    %v178 = vpop.f32.mrb[0].mxu0
    %179 = vdwg.mxu0
    %v180 = vmul.f32 %v175, %v175
    %181 = vadd.xlane.f32.xlu0 %v180
    %v182 = vpop.xlane.xlu0 %181
    %v183 = vrsqrt.pop %v182
    %v184 = vmul.f32 %v182, %v183
    %vm185 = vcmp.eq.f32.partialorder %v182, inf
    %v186 = vsel %vm185, %v182, %v184
    %vm187 = vcmp.eq.f32.partialorder %v182, 0.0
    %v188 = vand.u32 %v182, 2147483648
    %v189 = vsel %vm187, %v188, %v186
    %v190 = vadd.f32 %v189, 1e-08
    %v191 = vrcp.pop %v190
    %v192 = vmul.f32 %v175, %v191
    %193 = vst [vmem:[%s3] sm:$0xff] %v192
    %194 = vst [vmem:[#allocation7] sm:$0xff] %v138
    %vm195 = vcmask 7168
    %196 = vst.msk [vmem:[#allocation8] sm:$0xff] %vm195, %v191
    // Predicated region
    $region22: #{vascl_pturb_forward.5} parent=1 // pred_check
      _
    $region23: #{vascl_pturb_forward.5} parent=1 // pred_check_branch
      %198 = sbr.rel (0) target = $region25
    $region24: #{vascl_pturb_forward.5} parent=1 // pred_region
      _
    $region25: #{vascl_pturb_forward.5} parent=1 // pred_fallthru
      _
    // Predicated region
    $region26: #{vascl_pturb_forward.5} parent=1 // pred_check
      _
    $region27: #{vascl_pturb_forward.5} parent=1 // pred_check_branch
      %200 = sbr.rel (0) target = $region29
    $region28: #{vascl_pturb_forward.5} parent=1 // pred_region
      %s202 = ssub.s32 128, 128
      %203 = vsyncadd [#allocation4], %s202
      %s205 = sshll.u32 [#allocation7], 4
      %s206 = int_to_ptr.vmem [resolvable:$true] %s205
      %208 = dma.vmem_to_hbm [thread:$0]  %s206, 128, %s4, [#allocation4]
    $region29: #{vascl_pturb_forward.5} parent=1 // pred_fallthru
      _
    // Predicated region
    $region30: #{vascl_pturb_forward.5} parent=1 // pred_check
      _
    $region31: #{vascl_pturb_forward.5} parent=1 // pred_check_branch
      %210 = sbr.rel (0) target = $region33
    $region32: #{vascl_pturb_forward.5} parent=1 // pred_region
      %s212 = ssub.s32 128, 128
      %213 = vsyncadd [#allocation9], %s212
      %s215 = sshll.u32 [#allocation8], 4
      %s216 = int_to_ptr.vmem [resolvable:$true] %s215
      %218 = dma.vmem_to_hbm [thread:$0]  %s216, 128, %s5, [#allocation9]
    $region33: #{vascl_pturb_forward.5} parent=1 // pred_fallthru
      _
    // Predicated region
    $region34: #{vascl_pturb_forward.5} parent=1 // pred_check
      _
    $region35: #{vascl_pturb_forward.5} parent=1 // pred_check_branch
      %220 = sbr.rel (0) target = $region37
    $region36: #{vascl_pturb_forward.5} parent=1 // pred_region
      _
    $region37: #{vascl_pturb_forward.5} parent=1 // pred_fallthru
      _
    // Predicated region
    $region38: #{vascl_pturb_forward.5} parent=1 // pred_check
      _
    $region39: #{vascl_pturb_forward.5} parent=1 // pred_check_branch
      %222 = sbr.rel (0) target = $region41
    $region40: #{vascl_pturb_forward.5} parent=1 // pred_region
      %223 = dma.done [#allocation4], 128
    $region41: #{vascl_pturb_forward.5} parent=1 // pred_fallthru
      _
    // Predicated region
    $region42: #{vascl_pturb_forward.5} parent=1 // pred_check
      _
    $region43: #{vascl_pturb_forward.5} parent=1 // pred_check_branch
      %225 = sbr.rel (0) target = $region45
    $region44: #{vascl_pturb_forward.5} parent=1 // pred_region
      %226 = dma.done [#allocation9], 128
    $region45: #{vascl_pturb_forward.5} parent=1 // pred_fallthru
      _
    %227 = vsyncpa [#allocation3], 1
    %228 = vsyncpa [#allocation6], 1
    %229 = vsyncpa [#allocation4], 1
    %230 = vsyncpa [#allocation9], 1

// kernel: jvp__.2
$region0: #{jvp__.2}
  #allocation0 [shape = 'u32[]', space=smem, size = 0x4, offset = 0x4, fixed_abs, tag = 'smem constant byte address 0x4 - core index']
  #allocation1 [shape = 'u32[144,128]{1,0:T(1,128)}', space=vmem, size = 0x12000, scoped, tag = 'internal scratch']
  %s0 = inlined_call_operand.vmem [shape: f32[8,128], index: 0, kind: input, shape index: {}]
  %s1 = inlined_call_operand.vmem [shape: f32[128,128], index: 1, kind: input, shape index: {}]
  %s2 = inlined_call_operand.vmem [shape: f32[128,128], index: 2, kind: input, shape index: {}]
  %s3 = inlined_call_operand.vmem [shape: f32[8,128], index: 3, kind: output, shape index: {0}]
  %s4 = inlined_call_operand.vmem [shape: f32[8,128], index: 4, kind: output, shape index: {1}]
  %s5 = inlined_call_operand.vmem [shape: f32[8,1], index: 5, kind: output, shape index: {2}]
  %6 = xla_tuple %s3, %s4, %s5
  %s7 = sld [smem:[#allocation0]]
  $region38: #{jvp__.2} parent=0
    _
  %s9 = ssub.s32 1, %s7
  %s10 = scalar_select 0, %s9, %s7
  // Predicated region
  $region2: #{jvp__.2} parent=0 // pred_check
    _
  $region3: #{jvp__.2} parent=0 // pred_check_branch
    %12 = sbr.rel (0) target = $region5
  $region4: #{jvp__.2} parent=0 // pred_region
    _
  $region5: #{jvp__.2} parent=0 // pred_fallthru
    _
  // Predicated region
  $region6: #{jvp__.2} parent=0 // pred_check
    _
  $region7: #{jvp__.2} parent=0 // pred_check_branch
    %14 = sbr.rel (0) target = $region9
  $region8: #{jvp__.2} parent=0 // pred_region
    _
  $region9: #{jvp__.2} parent=0 // pred_fallthru
    _
  // Predicated region
  $region10: #{jvp__.2} parent=0 // pred_check
    _
  $region11: #{jvp__.2} parent=0 // pred_check_branch
    %16 = sbr.rel (0) target = $region13
  $region12: #{jvp__.2} parent=0 // pred_region
    _
  $region13: #{jvp__.2} parent=0 // pred_fallthru
    _
  %v18 = vld [vmem:[%s0] sm:$0xff]
  %v19 = vpack.c.bf16 %v18, %v18
  %v20 = vld [vmem:[%s1] sm:$0xff]
  %v21 = vld [vmem:[%s1 + $0x8] sm:$0xff]
  %v22 = vld [vmem:[%s1 + $0x10] sm:$0xff]
  %v23 = vld [vmem:[%s1 + $0x18] sm:$0xff]
  %v24 = vld [vmem:[%s1 + $0x20] sm:$0xff]
  %v25 = vld [vmem:[%s1 + $0x28] sm:$0xff]
  %v26 = vld [vmem:[%s1 + $0x30] sm:$0xff]
  %v27 = vld [vmem:[%s1 + $0x38] sm:$0xff]
  %v28 = vld [vmem:[%s1 + $0x40] sm:$0xff]
  %v29 = vld [vmem:[%s1 + $0x48] sm:$0xff]
  %v30 = vld [vmem:[%s1 + $0x50] sm:$0xff]
  %v31 = vld [vmem:[%s1 + $0x58] sm:$0xff]
  %v32 = vld [vmem:[%s1 + $0x60] sm:$0xff]
  %v33 = vld [vmem:[%s1 + $0x68] sm:$0xff]
  %v34 = vld [vmem:[%s1 + $0x70] sm:$0xff]
  %v35 = vld [vmem:[%s1 + $0x78] sm:$0xff]
  %v36 = vpack.c.bf16 %v21, %v20
  %v37 = vpack.c.bf16 %v23, %v22
  %v38 = vpack.c.bf16 %v25, %v24
  %v39 = vpack.c.bf16 %v27, %v26
  %v40 = vpack.c.bf16 %v29, %v28
  %v41 = vpack.c.bf16 %v31, %v30
  %v42 = vpack.c.bf16 %v33, %v32
  %v43 = vpack.c.bf16 %v35, %v34
  %v44 = vld [vmem:[%s2] sm:$0xff]
  %v45 = vld [vmem:[%s2 + $0x8] sm:$0xff]
  %v46 = vld [vmem:[%s2 + $0x10] sm:$0xff]
  %v47 = vld [vmem:[%s2 + $0x18] sm:$0xff]
  %v48 = vld [vmem:[%s2 + $0x20] sm:$0xff]
  %v49 = vld [vmem:[%s2 + $0x28] sm:$0xff]
  %v50 = vld [vmem:[%s2 + $0x30] sm:$0xff]
  %v51 = vld [vmem:[%s2 + $0x38] sm:$0xff]
  %v52 = vld [vmem:[%s2 + $0x40] sm:$0xff]
  %v53 = vld [vmem:[%s2 + $0x48] sm:$0xff]
  %v54 = vld [vmem:[%s2 + $0x50] sm:$0xff]
  %v55 = vld [vmem:[%s2 + $0x58] sm:$0xff]
  %v56 = vld [vmem:[%s2 + $0x60] sm:$0xff]
  %v57 = vld [vmem:[%s2 + $0x68] sm:$0xff]
  %v58 = vld [vmem:[%s2 + $0x70] sm:$0xff]
  %v59 = vld [vmem:[%s2 + $0x78] sm:$0xff]
  %v60 = vpack.c.bf16 %v45, %v44
  %v61 = vpack.c.bf16 %v47, %v46
  %v62 = vpack.c.bf16 %v49, %v48
  %v63 = vpack.c.bf16 %v51, %v50
  %v64 = vpack.c.bf16 %v53, %v52
  %v65 = vpack.c.bf16 %v55, %v54
  %v66 = vpack.c.bf16 %v57, %v56
  %v67 = vpack.c.bf16 %v59, %v58
  %68 = vmatprep.subr.bf16.mxu0 0
  %69 = vmatpush1.bf16.msra.mxu0 %v36
  %70 = vmatprep.subr.bf16.mxu0 0
  %71 = vmatpush1.bf16.msra.mxu0 %v37
  %72 = vmatprep.subr.bf16.mxu0 0
  %73 = vmatpush1.bf16.msra.mxu0 %v38
  %74 = vmatprep.subr.bf16.mxu0 0
  %75 = vmatpush1.bf16.msra.mxu0 %v39
  %76 = vmatprep.subr.bf16.mxu0 0
  %77 = vmatpush1.bf16.msra.mxu0 %v40
  %78 = vmatprep.subr.bf16.mxu0 0
  %79 = vmatpush1.bf16.msra.mxu0 %v41
  %80 = vmatprep.subr.bf16.mxu0 0
  %81 = vmatpush1.bf16.msra.mxu0 %v42
  %82 = vmatprep.subr.bf16.mxu0 0
  %83 = vmatpush1.bf16.msra.mxu0 %v43
  %84 = vmatprep.subr.bf16.mxu0 0
  %85 = vmatpush1.bf16.msra.mxu0 0
  %86 = vmatprep.subr.bf16.mxu0 0
  %87 = vmatpush1.bf16.msra.mxu0 0
  %88 = vmatprep.subr.bf16.mxu0 0
  %89 = vmatpush1.bf16.msra.mxu0 0
  %90 = vmatprep.subr.bf16.mxu0 0
  %91 = vmatpush1.bf16.msra.mxu0 0
  %92 = vmatprep.subr.bf16.mxu0 0
  %93 = vmatpush1.bf16.msra.mxu0 0
  %94 = vmatprep.subr.bf16.mxu0 0
  %95 = vmatpush1.bf16.msra.mxu0 0
  %96 = vmatprep.subr.bf16.mxu0 0
  %97 = vmatpush1.bf16.msra.mxu0 0
  %98 = vmatprep.subr.bf16.mxu0 0
  %99 = vmatpush1.bf16.msra.mxu0 0
  %100 = vmatprep.mubr.bf16.mxu0 0
  %101 = vmatmul.mubr.bf16.gmra.mrb[0].mxu0 %v19
  %v102 = vpop.f32.mrb[0].mxu0
  %v103 = vadd.f32 0.0, %v102
  %v104 = vpop.f32.mrb[0].mxu0
  %v105 = vpop.f32.mrb[0].mxu0
  %v106 = vpop.f32.mrb[0].mxu0
  %107 = vdwg.mxu0
  %v108 = vmax.f32 %v103, 0.0
  %v109 = vpack.c.bf16 %v108, %v108
  %110 = vmatprep.subr.bf16.mxu0 0
  %111 = vmatpush1.bf16.msra.mxu0 %v60
  %112 = vmatprep.subr.bf16.mxu0 0
  %113 = vmatpush1.bf16.msra.mxu0 %v61
  %114 = vmatprep.subr.bf16.mxu0 0
  %115 = vmatpush1.bf16.msra.mxu0 %v62
  %116 = vmatprep.subr.bf16.mxu0 0
  %117 = vmatpush1.bf16.msra.mxu0 %v63
  %118 = vmatprep.subr.bf16.mxu0 0
  %119 = vmatpush1.bf16.msra.mxu0 %v64
  %120 = vmatprep.subr.bf16.mxu0 0
  %121 = vmatpush1.bf16.msra.mxu0 %v65
  %122 = vmatprep.subr.bf16.mxu0 0
  %123 = vmatpush1.bf16.msra.mxu0 %v66
  %124 = vmatprep.subr.bf16.mxu0 0
  %125 = vmatpush1.bf16.msra.mxu0 %v67
  %126 = vmatprep.subr.bf16.mxu0 0
  %127 = vmatpush1.bf16.msra.mxu0 0
  %128 = vmatprep.subr.bf16.mxu0 0
  %129 = vmatpush1.bf16.msra.mxu0 0
  %130 = vmatprep.subr.bf16.mxu0 0
  %131 = vmatpush1.bf16.msra.mxu0 0
  %132 = vmatprep.subr.bf16.mxu0 0
  %133 = vmatpush1.bf16.msra.mxu0 0
  %134 = vmatprep.subr.bf16.mxu0 0
  %135 = vmatpush1.bf16.msra.mxu0 0
  %136 = vmatprep.subr.bf16.mxu0 0
  %137 = vmatpush1.bf16.msra.mxu0 0
  %138 = vmatprep.subr.bf16.mxu0 0
  %139 = vmatpush1.bf16.msra.mxu0 0
  %140 = vmatprep.subr.bf16.mxu0 0
  %141 = vmatpush1.bf16.msra.mxu0 0
  %142 = vmatprep.mubr.bf16.mxu0 0
  %143 = vmatmul.mubr.bf16.gmra.mrb[0].mxu0 %v109
  %v144 = vpop.f32.mrb[0].mxu0
  %v145 = vadd.f32 0.0, %v144
  %v146 = vpop.f32.mrb[0].mxu0
  %v147 = vpop.f32.mrb[0].mxu0
  %v148 = vpop.f32.mrb[0].mxu0
  %149 = vdwg.mxu0
  %v150 = vmul.f32 %v145, %v145
  %151 = vadd.xlane.f32.xlu0 %v150
  %v152 = vpop.xlane.xlu0 %151
  %v153 = vrsqrt.pop %v152
  %v154 = vmul.f32 %v152, %v153
  %vm155 = vcmp.eq.f32.partialorder %v152, inf
  %v156 = vsel %vm155, %v152, %v154
  %vm157 = vcmp.eq.f32.partialorder %v152, 0.0
  %v158 = vand.u32 %v152, 2147483648
  %v159 = vsel %vm157, %v158, %v156
  %v160 = vadd.f32 %v159, 1e-08
  %v161 = vrcp.pop %v160
  %v162 = vmul.f32 %v145, %v161
  %163 = vst [vmem:[%s3] sm:$0xff] %v162
  %164 = vst [vmem:[%s4] sm:$0xff] %v108
  %vm165 = vcmask 7168
  %166 = vst.msk [vmem:[%s5] sm:$0xff] %vm165, %v161
  // Predicated region
  $region14: #{jvp__.2} parent=0 // pred_check
    _
  $region15: #{jvp__.2} parent=0 // pred_check_branch
    %168 = sbr.rel (0) target = $region17
  $region16: #{jvp__.2} parent=0 // pred_region
    _
  $region17: #{jvp__.2} parent=0 // pred_fallthru
    _
  // Predicated region
  $region18: #{jvp__.2} parent=0 // pred_check
    _
  $region19: #{jvp__.2} parent=0 // pred_check_branch
    %170 = sbr.rel (0) target = $region21
  $region20: #{jvp__.2} parent=0 // pred_region
    _
  $region21: #{jvp__.2} parent=0 // pred_fallthru
    _
  // Predicated region
  $region22: #{jvp__.2} parent=0 // pred_check
    _
  $region23: #{jvp__.2} parent=0 // pred_check_branch
    %172 = sbr.rel (0) target = $region25
  $region24: #{jvp__.2} parent=0 // pred_region
    _
  $region25: #{jvp__.2} parent=0 // pred_fallthru
    _
  // Predicated region
  $region26: #{jvp__.2} parent=0 // pred_check
    _
  $region27: #{jvp__.2} parent=0 // pred_check_branch
    %174 = sbr.rel (0) target = $region29
  $region28: #{jvp__.2} parent=0 // pred_region
    _
  $region29: #{jvp__.2} parent=0 // pred_fallthru
    _
  // Predicated region
  $region30: #{jvp__.2} parent=0 // pred_check
    _
  $region31: #{jvp__.2} parent=0 // pred_check_branch
    %176 = sbr.rel (0) target = $region33
  $region32: #{jvp__.2} parent=0 // pred_region
    _
  $region33: #{jvp__.2} parent=0 // pred_fallthru
    _
  // Predicated region
  $region34: #{jvp__.2} parent=0 // pred_check
    _
  $region35: #{jvp__.2} parent=0 // pred_check_branch
    %178 = sbr.rel (0) target = $region37
  $region36: #{jvp__.2} parent=0 // pred_region
    _
  $region37: #{jvp__.2} parent=0 // pred_fallthru
    _

// kernel: split.3
$region0: #{split.3}
  #allocation0 [shape = 'u32[2048]{0}', space=vmem, size = 0x2000, scoped, tag = 'scoped memory for split.3']
  #allocation1 [shape = 'u32[2048]{0}', space=vmem, size = 0x2000, scoped, tag = 'scoped memory for split.3']
  #allocation2 [shape = 'u32[2048]{0}', space=vmem, size = 0x2000, scoped, tag = 'scoped memory for split.3']
  #allocation3 [shape = 'u32[2048]{0}', space=vmem, size = 0x2000, scoped, tag = 'scoped memory for split.3']
  #allocation4 [shape = 'u32[2048]{0}', space=vmem, size = 0x2000, scoped, tag = 'scoped memory for split.3']
  #allocation5 [shape = 's32[1]{0}', space=sflag, size = 0x4, scoped, tag = 'scoped memory for split.3']
  %s0 = inlined_call_operand.vmem [shape: f32[8,5], index: 0, kind: input, shape index: {}]
  %s1 = inlined_call_operand.vmem [shape: f32[8,4], index: 1, kind: output, shape index: {}]
  %v2 = vld [vmem:[%s0] sm:$0xff]
  %v3 = vlaneseq
  %v4 = vand.u32 %v3, 127
  %vm5 = vcmp.lt.s32.totalorder %v4, 1
  %v6 = vsel %vm5, 0, %v2
  %7 = vrot.lane.b32.xlu0 %v6, 127
  %v8 = vpop.permute.xlu0 %7
  %9 = vst [vmem:[%s1] sm:$0xff] %v8

// kernel: vascl_pturb_forward.7
$region0: #{vascl_pturb_forward.7}
  #allocation0 [shape = 'u32[]', space=smem, size = 0x4, offset = 0x4, fixed_abs, tag = 'smem constant byte address 0x4 - core index']
  #allocation1 [shape = 'u32[144,128]{1,0:T(1,128)}', space=vmem, size = 0x12000, scoped, tag = 'internal scratch']
  %s0 = inlined_call_operand.vmem [shape: f32[8,128], index: 0, kind: input, shape index: {}]
  %s1 = inlined_call_operand.vmem [shape: f32[8,128], index: 1, kind: output, shape index: {}]
  %s2 = sld [smem:[#allocation0]]
  $region14: #{vascl_pturb_forward.7} parent=0
    _
  %s4 = ssub.s32 1, %s2
  %s5 = scalar_select 0, %s4, %s2
  // Predicated region
  $region2: #{vascl_pturb_forward.7} parent=0 // pred_check
    _
  $region3: #{vascl_pturb_forward.7} parent=0 // pred_check_branch
    %7 = sbr.rel (0) target = $region5
  $region4: #{vascl_pturb_forward.7} parent=0 // pred_region
    _
  $region5: #{vascl_pturb_forward.7} parent=0 // pred_fallthru
    _
  %v8 = vld [vmem:[%s0] sm:$0xff]
  %v9 = vmul.f32 %v8, %v8
  %10 = vadd.xlane.f32.xlu0 %v9
  %v11 = vpop.xlane.xlu0 %10
  %v12 = vrsqrt.pop %v11
  %v13 = vmul.f32 %v11, %v12
  %vm14 = vcmp.eq.f32.partialorder %v11, inf
  %v15 = vsel %vm14, %v11, %v13
  %vm16 = vcmp.eq.f32.partialorder %v11, 0.0
  %v17 = vand.u32 %v11, 2147483648
  %v18 = vsel %vm16, %v17, %v15
  %v19 = vadd.f32 %v18, 1e-08
  %v20 = vrcp.pop %v19
  %v21 = vmul.f32 %v8, %v20
  %22 = vst [vmem:[%s1] sm:$0xff] %v21
  // Predicated region
  $region6: #{vascl_pturb_forward.7} parent=0 // pred_check
    _
  $region7: #{vascl_pturb_forward.7} parent=0 // pred_check_branch
    %24 = sbr.rel (0) target = $region9
  $region8: #{vascl_pturb_forward.7} parent=0 // pred_region
    _
  $region9: #{vascl_pturb_forward.7} parent=0 // pred_fallthru
    _
  // Predicated region
  $region10: #{vascl_pturb_forward.7} parent=0 // pred_check
    _
  $region11: #{vascl_pturb_forward.7} parent=0 // pred_check_branch
    %26 = sbr.rel (0) target = $region13
  $region12: #{vascl_pturb_forward.7} parent=0 // pred_region
    _
  $region13: #{vascl_pturb_forward.7} parent=0 // pred_fallthru
    _

// kernel: vascl_pturb_forward.8
$region0: #{vascl_pturb_forward.8}
  #allocation0 [shape = 'u32[]', space=smem, size = 0x4, offset = 0x4, fixed_abs, tag = 'smem constant byte address 0x4 - core index']
  #allocation1 [shape = 'u32[144,128]{1,0:T(1,128)}', space=vmem, size = 0x12000, scoped, tag = 'internal scratch']
  %s0 = inlined_call_operand.vmem [shape: f32[8,128], index: 0, kind: input, shape index: {}]
  %s1 = inlined_call_operand.vmem [shape: f32[128,128], index: 1, kind: input, shape index: {}]
  %s2 = inlined_call_operand.vmem [shape: f32[128,128], index: 2, kind: input, shape index: {}]
  %s3 = inlined_call_operand.vmem [shape: f32[8,128], index: 3, kind: output, shape index: {0}]
  %s4 = inlined_call_operand.hbm [shape: f32[8,128], index: 4, kind: output, shape index: {1}]
  %s5 = inlined_call_operand.hbm [shape: f32[8,1], index: 5, kind: output, shape index: {2}]
  %6 = xla_tuple %s3, %s4, %s5
  %s7 = sld [smem:[#allocation0]]
  $region38: #{vascl_pturb_forward.8} parent=0
    _
  %s9 = ssub.s32 1, %s7
  %s10 = scalar_select 0, %s9, %s7
  $region1: #{vascl_pturb_forward.8} parent=0
    #allocation2 [shape = 'u8[4096]{0}', space=vmem, size = 0x1000, scoped, tag = 'output window, operand 1, single buffered']
    #allocation3 [shape = 's32[1]{0}', space=sflag, size = 0x4, scoped, tag = 'scoped memory for vascl_pturb_forward.8']
    #allocation4 [shape = 'u8[4096]{0}', space=vmem, size = 0x1000, scoped, tag = 'output window, operand 2, single buffered']
    #allocation5 [shape = 's32[1]{0}', space=sflag, size = 0x4, scoped, tag = 'scoped memory for vascl_pturb_forward.8']
    %11 = vsyncpa [#allocation3], 0
    %12 = vsyncpa [#allocation5], 0
    // Predicated region
    $region2: #{vascl_pturb_forward.8} parent=1 // pred_check
      _
    $region3: #{vascl_pturb_forward.8} parent=1 // pred_check_branch
      %14 = sbr.rel (0) target = $region5
    $region4: #{vascl_pturb_forward.8} parent=1 // pred_region
      _
    $region5: #{vascl_pturb_forward.8} parent=1 // pred_fallthru
      _
    // Predicated region
    $region6: #{vascl_pturb_forward.8} parent=1 // pred_check
      _
    $region7: #{vascl_pturb_forward.8} parent=1 // pred_check_branch
      %16 = sbr.rel (0) target = $region9
    $region8: #{vascl_pturb_forward.8} parent=1 // pred_region
      _
    $region9: #{vascl_pturb_forward.8} parent=1 // pred_fallthru
      _
    // Predicated region
    $region10: #{vascl_pturb_forward.8} parent=1 // pred_check
      _
    $region11: #{vascl_pturb_forward.8} parent=1 // pred_check_branch
      %18 = sbr.rel (0) target = $region13
    $region12: #{vascl_pturb_forward.8} parent=1 // pred_region
      _
    $region13: #{vascl_pturb_forward.8} parent=1 // pred_fallthru
      _
    %v20 = vld [vmem:[%s0] sm:$0xff]
    %v21 = vpack.c.bf16 %v20, %v20
    %v22 = vld [vmem:[%s1] sm:$0xff]
    %v23 = vld [vmem:[%s1 + $0x8] sm:$0xff]
    %v24 = vld [vmem:[%s1 + $0x10] sm:$0xff]
    %v25 = vld [vmem:[%s1 + $0x18] sm:$0xff]
    %v26 = vld [vmem:[%s1 + $0x20] sm:$0xff]
    %v27 = vld [vmem:[%s1 + $0x28] sm:$0xff]
    %v28 = vld [vmem:[%s1 + $0x30] sm:$0xff]
    %v29 = vld [vmem:[%s1 + $0x38] sm:$0xff]
    %v30 = vld [vmem:[%s1 + $0x40] sm:$0xff]
    %v31 = vld [vmem:[%s1 + $0x48] sm:$0xff]
    %v32 = vld [vmem:[%s1 + $0x50] sm:$0xff]
    %v33 = vld [vmem:[%s1 + $0x58] sm:$0xff]
    %v34 = vld [vmem:[%s1 + $0x60] sm:$0xff]
    %v35 = vld [vmem:[%s1 + $0x68] sm:$0xff]
    %v36 = vld [vmem:[%s1 + $0x70] sm:$0xff]
    %v37 = vld [vmem:[%s1 + $0x78] sm:$0xff]
    %v38 = vpack.c.bf16 %v23, %v22
    %v39 = vpack.c.bf16 %v25, %v24
    %v40 = vpack.c.bf16 %v27, %v26
    %v41 = vpack.c.bf16 %v29, %v28
    %v42 = vpack.c.bf16 %v31, %v30
    %v43 = vpack.c.bf16 %v33, %v32
    %v44 = vpack.c.bf16 %v35, %v34
    %v45 = vpack.c.bf16 %v37, %v36
    %v46 = vld [vmem:[%s2] sm:$0xff]
    %v47 = vld [vmem:[%s2 + $0x8] sm:$0xff]
    %v48 = vld [vmem:[%s2 + $0x10] sm:$0xff]
    %v49 = vld [vmem:[%s2 + $0x18] sm:$0xff]
    %v50 = vld [vmem:[%s2 + $0x20] sm:$0xff]
    %v51 = vld [vmem:[%s2 + $0x28] sm:$0xff]
    %v52 = vld [vmem:[%s2 + $0x30] sm:$0xff]
    %v53 = vld [vmem:[%s2 + $0x38] sm:$0xff]
    %v54 = vld [vmem:[%s2 + $0x40] sm:$0xff]
    %v55 = vld [vmem:[%s2 + $0x48] sm:$0xff]
    %v56 = vld [vmem:[%s2 + $0x50] sm:$0xff]
    %v57 = vld [vmem:[%s2 + $0x58] sm:$0xff]
    %v58 = vld [vmem:[%s2 + $0x60] sm:$0xff]
    %v59 = vld [vmem:[%s2 + $0x68] sm:$0xff]
    %v60 = vld [vmem:[%s2 + $0x70] sm:$0xff]
    %v61 = vld [vmem:[%s2 + $0x78] sm:$0xff]
    %v62 = vpack.c.bf16 %v47, %v46
    %v63 = vpack.c.bf16 %v49, %v48
    %v64 = vpack.c.bf16 %v51, %v50
    %v65 = vpack.c.bf16 %v53, %v52
    %v66 = vpack.c.bf16 %v55, %v54
    %v67 = vpack.c.bf16 %v57, %v56
    %v68 = vpack.c.bf16 %v59, %v58
    %v69 = vpack.c.bf16 %v61, %v60
    %70 = vmatprep.subr.bf16.mxu0 0
    %71 = vmatpush1.bf16.msra.mxu0 %v38
    %72 = vmatprep.subr.bf16.mxu0 0
    %73 = vmatpush1.bf16.msra.mxu0 %v39
    %74 = vmatprep.subr.bf16.mxu0 0
    %75 = vmatpush1.bf16.msra.mxu0 %v40
    %76 = vmatprep.subr.bf16.mxu0 0
    %77 = vmatpush1.bf16.msra.mxu0 %v41
    %78 = vmatprep.subr.bf16.mxu0 0
    %79 = vmatpush1.bf16.msra.mxu0 %v42
    %80 = vmatprep.subr.bf16.mxu0 0
    %81 = vmatpush1.bf16.msra.mxu0 %v43
    %82 = vmatprep.subr.bf16.mxu0 0
    %83 = vmatpush1.bf16.msra.mxu0 %v44
    %84 = vmatprep.subr.bf16.mxu0 0
    %85 = vmatpush1.bf16.msra.mxu0 %v45
    %86 = vmatprep.subr.bf16.mxu0 0
    %87 = vmatpush1.bf16.msra.mxu0 0
    %88 = vmatprep.subr.bf16.mxu0 0
    %89 = vmatpush1.bf16.msra.mxu0 0
    %90 = vmatprep.subr.bf16.mxu0 0
    %91 = vmatpush1.bf16.msra.mxu0 0
    %92 = vmatprep.subr.bf16.mxu0 0
    %93 = vmatpush1.bf16.msra.mxu0 0
    %94 = vmatprep.subr.bf16.mxu0 0
    %95 = vmatpush1.bf16.msra.mxu0 0
    %96 = vmatprep.subr.bf16.mxu0 0
    %97 = vmatpush1.bf16.msra.mxu0 0
    %98 = vmatprep.subr.bf16.mxu0 0
    %99 = vmatpush1.bf16.msra.mxu0 0
    %100 = vmatprep.subr.bf16.mxu0 0
    %101 = vmatpush1.bf16.msra.mxu0 0
    %102 = vmatprep.mubr.bf16.mxu0 0
    %103 = vmatmul.mubr.bf16.gmra.mrb[0].mxu0 %v21
    %v104 = vpop.f32.mrb[0].mxu0
    %v105 = vadd.f32 0.0, %v104
    %v106 = vpop.f32.mrb[0].mxu0
    %v107 = vpop.f32.mrb[0].mxu0
    %v108 = vpop.f32.mrb[0].mxu0
    %109 = vdwg.mxu0
    %v110 = vmax.f32 %v105, 0.0
    %v111 = vpack.c.bf16 %v110, %v110
    %112 = vmatprep.subr.bf16.mxu0 0
    %113 = vmatpush1.bf16.msra.mxu0 %v62
    %114 = vmatprep.subr.bf16.mxu0 0
    %115 = vmatpush1.bf16.msra.mxu0 %v63
    %116 = vmatprep.subr.bf16.mxu0 0
    %117 = vmatpush1.bf16.msra.mxu0 %v64
    %118 = vmatprep.subr.bf16.mxu0 0
    %119 = vmatpush1.bf16.msra.mxu0 %v65
    %120 = vmatprep.subr.bf16.mxu0 0
    %121 = vmatpush1.bf16.msra.mxu0 %v66
    %122 = vmatprep.subr.bf16.mxu0 0
    %123 = vmatpush1.bf16.msra.mxu0 %v67
    %124 = vmatprep.subr.bf16.mxu0 0
    %125 = vmatpush1.bf16.msra.mxu0 %v68
    %126 = vmatprep.subr.bf16.mxu0 0
    %127 = vmatpush1.bf16.msra.mxu0 %v69
    %128 = vmatprep.subr.bf16.mxu0 0
    %129 = vmatpush1.bf16.msra.mxu0 0
    %130 = vmatprep.subr.bf16.mxu0 0
    %131 = vmatpush1.bf16.msra.mxu0 0
    %132 = vmatprep.subr.bf16.mxu0 0
    %133 = vmatpush1.bf16.msra.mxu0 0
    %134 = vmatprep.subr.bf16.mxu0 0
    %135 = vmatpush1.bf16.msra.mxu0 0
    %136 = vmatprep.subr.bf16.mxu0 0
    %137 = vmatpush1.bf16.msra.mxu0 0
    %138 = vmatprep.subr.bf16.mxu0 0
    %139 = vmatpush1.bf16.msra.mxu0 0
    %140 = vmatprep.subr.bf16.mxu0 0
    %141 = vmatpush1.bf16.msra.mxu0 0
    %142 = vmatprep.subr.bf16.mxu0 0
    %143 = vmatpush1.bf16.msra.mxu0 0
    %144 = vmatprep.mubr.bf16.mxu0 0
    %145 = vmatmul.mubr.bf16.gmra.mrb[0].mxu0 %v111
    %v146 = vpop.f32.mrb[0].mxu0
    %v147 = vadd.f32 0.0, %v146
    %v148 = vpop.f32.mrb[0].mxu0
    %v149 = vpop.f32.mrb[0].mxu0
    %v150 = vpop.f32.mrb[0].mxu0
    %151 = vdwg.mxu0
    %v152 = vmul.f32 %v147, %v147
    %153 = vadd.xlane.f32.xlu0 %v152
    %v154 = vpop.xlane.xlu0 %153
    %v155 = vrsqrt.pop %v154
    %v156 = vmul.f32 %v154, %v155
    %vm157 = vcmp.eq.f32.partialorder %v154, inf
    %v158 = vsel %vm157, %v154, %v156
    %vm159 = vcmp.eq.f32.partialorder %v154, 0.0
    %v160 = vand.u32 %v154, 2147483648
    %v161 = vsel %vm159, %v160, %v158
    %v162 = vadd.f32 %v161, 1e-08
    %v163 = vrcp.pop %v162
    %v164 = vmul.f32 %v147, %v163
    %165 = vst [vmem:[%s3] sm:$0xff] %v164
    %166 = vst [vmem:[#allocation2] sm:$0xff] %v110
    %vm167 = vcmask 7168
    %168 = vst.msk [vmem:[#allocation4] sm:$0xff] %vm167, %v163
    // Predicated region
    $region14: #{vascl_pturb_forward.8} parent=1 // pred_check
      _
    $region15: #{vascl_pturb_forward.8} parent=1 // pred_check_branch
      %170 = sbr.rel (0) target = $region17
    $region16: #{vascl_pturb_forward.8} parent=1 // pred_region
      _
    $region17: #{vascl_pturb_forward.8} parent=1 // pred_fallthru
      _
    // Predicated region
    $region18: #{vascl_pturb_forward.8} parent=1 // pred_check
      _
    $region19: #{vascl_pturb_forward.8} parent=1 // pred_check_branch
      %172 = sbr.rel (0) target = $region21
    $region20: #{vascl_pturb_forward.8} parent=1 // pred_region
      %s174 = ssub.s32 128, 128
      %175 = vsyncadd [#allocation3], %s174
      %s177 = sshll.u32 [#allocation2], 4
      %s178 = int_to_ptr.vmem [resolvable:$true] %s177
      %180 = dma.vmem_to_hbm [thread:$0]  %s178, 128, %s4, [#allocation3]
    $region21: #{vascl_pturb_forward.8} parent=1 // pred_fallthru
      _
    // Predicated region
    $region22: #{vascl_pturb_forward.8} parent=1 // pred_check
      _
    $region23: #{vascl_pturb_forward.8} parent=1 // pred_check_branch
      %182 = sbr.rel (0) target = $region25
    $region24: #{vascl_pturb_forward.8} parent=1 // pred_region
      %s184 = ssub.s32 128, 128
      %185 = vsyncadd [#allocation5], %s184
      %s187 = sshll.u32 [#allocation4], 4
      %s188 = int_to_ptr.vmem [resolvable:$true] %s187
      %190 = dma.vmem_to_hbm [thread:$0]  %s188, 128, %s5, [#allocation5]
    $region25: #{vascl_pturb_forward.8} parent=1 // pred_fallthru
      _
    // Predicated region
    $region26: #{vascl_pturb_forward.8} parent=1 // pred_check
      _
    $region27: #{vascl_pturb_forward.8} parent=1 // pred_check_branch
      %192 = sbr.rel (0) target = $region29
    $region28: #{vascl_pturb_forward.8} parent=1 // pred_region
      _
    $region29: #{vascl_pturb_forward.8} parent=1 // pred_fallthru
      _
    // Predicated region
    $region30: #{vascl_pturb_forward.8} parent=1 // pred_check
      _
    $region31: #{vascl_pturb_forward.8} parent=1 // pred_check_branch
      %194 = sbr.rel (0) target = $region33
    $region32: #{vascl_pturb_forward.8} parent=1 // pred_region
      %195 = dma.done [#allocation3], 128
    $region33: #{vascl_pturb_forward.8} parent=1 // pred_fallthru
      _
    // Predicated region
    $region34: #{vascl_pturb_forward.8} parent=1 // pred_check
      _
    $region35: #{vascl_pturb_forward.8} parent=1 // pred_check_branch
      %197 = sbr.rel (0) target = $region37
    $region36: #{vascl_pturb_forward.8} parent=1 // pred_region
      %198 = dma.done [#allocation5], 128
    $region37: #{vascl_pturb_forward.8} parent=1 // pred_fallthru
      _
    %199 = vsyncpa [#allocation3], 1
    %200 = vsyncpa [#allocation5], 1

</llo_original>
